<compile_context>
chip_gen: v5e
topology: v5e:2x2
jax: 0.10.0
libtpu: 0.0.40
codegen_flags: <defaults>
</compile_context>

<pallas_src>
import jax
import jax.numpy as jnp
from jax.experimental import pallas as pl
from jax.experimental.pallas import tpu as pltpu

HIDDEN = 512
STD_CONST = 0.05
TILE_B_MAX = 256          # MXU-filling on v6e/v7x, still efficient on v5e
LANE = 128                # pad mean-head width to a multiple of this


def _round_up(n, m):
    return ((n + m - 1) // m) * m


def _pick_tile(B):
    """Batch tile: multiple of 16 (bf16 sublane packing), capped at TILE_B_MAX."""
    return min(max(_round_up(B, 16), 16), TILE_B_MAX)


def _policy_kernel(x_ref, w1_ref, b1_ref, w2_ref, b2_ref, w3_ref, b3_ref,
                   wm_ref, bm_ref, mean_ref, h_ref):
    """One (TILE_B, obs_dim) batch tile -> (TILE_B, LANE-padded act) mean tile.

    Matmuls take bf16 inputs and accumulate in f32; the hidden activation is
    held in a bf16 VMEM scratch (halves store/load traffic between layers).
    """
    # fc1: Linear -> ReLU
    h = jnp.dot(x_ref[...].astype(jnp.bfloat16), w1_ref[...],
                preferred_element_type=jnp.float32)
    h_ref[...] = jnp.maximum(h + b1_ref[...], 0.0).astype(jnp.bfloat16)

    # fc2: Linear -> ReLU
    h = jnp.dot(h_ref[...], w2_ref[...], preferred_element_type=jnp.float32)
    h_ref[...] = jnp.maximum(h + b2_ref[...], 0.0).astype(jnp.bfloat16)

    # fc3: Linear -> ReLU
    h = jnp.dot(h_ref[...], w3_ref[...], preferred_element_type=jnp.float32)
    h_ref[...] = jnp.maximum(h + b3_ref[...], 0.0).astype(jnp.bfloat16)

    # mean head (output padded to a lane-dense width -> unmasked stores)
    m = jnp.dot(h_ref[...], wm_ref[...],
                preferred_element_type=jnp.float32) + bm_ref[...]
    mean_ref[...] = m.astype(mean_ref.dtype)


def prepare_params(params):
    """One-time prep (call OUTSIDE the per-forward jit):
       bf16 weight casts, (1, N) bias reshapes, lane-dense head padding."""
    w1, b1, w2, b2, w3, b3, wm, bm, log_std = params
    act_dim = wm.shape[1]
    act_pad = _round_up(max(act_dim, LANE), LANE)

    wm_p = jnp.zeros((HIDDEN, act_pad), jnp.float32).at[:, :act_dim].set(wm)
    bm_p = jnp.zeros((1, act_pad), jnp.float32).at[0, :act_dim].set(bm)

    return (
        w1.astype(jnp.bfloat16), b1.reshape(1, -1).astype(jnp.float32),
        w2.astype(jnp.bfloat16), b2.reshape(1, -1).astype(jnp.float32),
        w3.astype(jnp.bfloat16), b3.reshape(1, -1).astype(jnp.float32),
        wm_p.astype(jnp.bfloat16), bm_p,
        log_std.astype(jnp.float32),
    )


@jax.jit
def policy_forward(x, prepared):
    """x: (B, obs_dim) f32.  prepared = prepare_params(params).
       Returns (mean (B, act_dim) f32, std (act_dim,) f32)."""
    w1b, b1, w2b, b2, w3b, b3, wmb, bm, log_std = prepared
    B, obs_dim = x.shape
    act_pad = wmb.shape[1]
    act_dim = log_std.shape[0]

    tile_b = _pick_tile(B)
    n_tiles = pl.cdiv(B, tile_b)
    B_pad = n_tiles * tile_b
    if B_pad != B:
        x = jnp.pad(x, ((0, B_pad - B), (0, 0)))

    const = lambda i: (0, 0)    # weights/biases resident across the grid
    row = lambda i: (i, 0)      # batch-tiled activations

    flops = 2 * B_pad * (obs_dim * HIDDEN + 2 * HIDDEN * HIDDEN + HIDDEN * act_pad)
    bytes_accessed = (
        (w1b.size + w2b.size + w3b.size + wmb.size) * 2      # bf16 weights
        + (b1.size + b2.size + b3.size + bm.size) * 4        # f32 biases
        + B_pad * obs_dim * 4 + B_pad * act_pad * 4)         # x in, mean out

    mean = pl.pallas_call(
        _policy_kernel,
        out_shape=jax.ShapeDtypeStruct((B_pad, act_pad), jnp.float32),
        grid=(n_tiles,),
        in_specs=[
            pl.BlockSpec((tile_b, obs_dim), row),       # x tile
            pl.BlockSpec((obs_dim, HIDDEN), const),     # w1
            pl.BlockSpec((1, HIDDEN), const),           # b1
            pl.BlockSpec((HIDDEN, HIDDEN), const),      # w2
            pl.BlockSpec((1, HIDDEN), const),           # b2
            pl.BlockSpec((HIDDEN, HIDDEN), const),      # w3
            pl.BlockSpec((1, HIDDEN), const),           # b3
            pl.BlockSpec((HIDDEN, act_pad), const),     # wm (lane-padded)
            pl.BlockSpec((1, act_pad), const),          # bm (lane-padded)
        ],
        out_specs=pl.BlockSpec((tile_b, act_pad), row),
        scratch_shapes=[pltpu.VMEM((tile_b, HIDDEN), jnp.bfloat16)],
        compiler_params=pltpu.CompilerParams(
            dimension_semantics=("parallel",),          # v7x: batch tiles across 2 TCs
            vmem_limit_bytes=32 * 1024 * 1024),         # guardrail; footprint is a few MiB
        cost_estimate=pl.CostEstimate(
            flops=flops, transcendentals=0, bytes_accessed=bytes_accessed),
    )(x, w1b, b1, w2b, b2, w3b, b3, wmb, bm)

    mean = mean[:B, :act_dim]
    # std is independent of x: computed in the wrapper, not the kernel.
    std = jnp.exp(log_std) + STD_CONST
    return mean, std


def init_params(key, obs_dim, act_dim):
    """Deterministic init mirroring nn.Linear default: U(-1/sqrt(fan_in), 1/sqrt(fan_in))."""
    def linear(key, fan_in, fan_out):
        kw, kb = jax.random.split(key)
        bound = 1.0 / jnp.sqrt(fan_in)
        w = jax.random.uniform(kw, (fan_in, fan_out), jnp.float32, -bound, bound)
        b = jax.random.uniform(kb, (fan_out,), jnp.float32, -bound, bound)
        return w, b

    k1, k2, k3, k4 = jax.random.split(key, 4)
    w1, b1 = linear(k1, obs_dim, HIDDEN)
    w2, b2 = linear(k2, HIDDEN, HIDDEN)
    w3, b3 = linear(k3, HIDDEN, HIDDEN)
    wm, bm = linear(k4, HIDDEN, act_dim)
    log_std = jnp.zeros((act_dim,), jnp.float32)  # nn.Parameter(torch.zeros(act_dim))
    return (w1, b1, w2, b2, w3, b3, wm, bm, log_std)


def policy_forward_ref_f32(x, params):
    """Pure-JAX f32 reference of the PyTorch forward."""
    w1, b1, w2, b2, w3, b3, wm, bm, log_std = params
    h = jnp.maximum(x @ w1 + b1, 0.0)
    h = jnp.maximum(h @ w2 + b2, 0.0)
    h = jnp.maximum(h @ w3 + b3, 0.0)
    mean = h @ wm + bm
    std = jnp.exp(log_std) + STD_CONST
    return mean, std


def policy_forward_ref_bf16(x, params):
    """Matched-precision reference: bf16 matmul inputs, f32 accumulation."""
    w1, b1, w2, b2, w3, b3, wm, bm, log_std = params
    bf = jnp.bfloat16
    dot = lambda a, b: jnp.dot(a.astype(bf), b.astype(bf),
                               preferred_element_type=jnp.float32)
    h = jnp.maximum(dot(x, w1) + b1, 0.0)
    h = jnp.maximum(dot(h, w2) + b2, 0.0)
    h = jnp.maximum(dot(h, w3) + b3, 0.0)
    mean = dot(h, wm) + bm
    std = jnp.exp(log_std) + STD_CONST
    return mean, std


if __name__ == "__main__":
    key = jax.random.PRNGKey(0)
    kx, kp = jax.random.split(key)

    batch, obs_dim, act_dim = 2, 16, 8
    x = jax.random.normal(kx, (batch, obs_dim), jnp.float32)
    params = init_params(kp, obs_dim, act_dim)

    prepared = prepare_params(params)           # one-time: bf16 casts + head padding
    mean, std = policy_forward(x, prepared)
    jax.block_until_ready((mean, std))

    assert mean.shape == (batch, act_dim)
    assert std.shape == (act_dim,)

    # Matched-precision check (same bf16-in / f32-accumulate recipe): tight tolerance.
    mean_bf, std_ref = policy_forward_ref_bf16(x, params)
    assert jnp.allclose(mean, mean_bf, atol=1e-3, rtol=1e-3)
    assert jnp.allclose(std, std_ref, atol=1e-6, rtol=1e-6)

    # Full-f32 PyTorch-semantics check: looser tolerance due to bf16 weight storage.
    mean_f32, _ = policy_forward_ref_f32(x, params)
    assert jnp.allclose(mean, mean_f32, atol=5e-2, rtol=5e-2)

    # Exercise a multi-tile batch path as well (grid > 1, padded batch).
    xb = jax.random.normal(kx, (300, obs_dim), jnp.float32)
    mb, _ = policy_forward(xb, prepared)
    jax.block_until_ready(mb)
    mb_ref, _ = policy_forward_ref_bf16(xb, params)
    assert mb.shape == (300, act_dim)
    assert jnp.allclose(mb, mb_ref, atol=1e-3, rtol=1e-3)

    print("KERNEL_OK")
</pallas_src>

<mosaic_0001>
module attributes {stable_mosaic.version = 11 : i64} {
  func.func @_policy_kernel(%arg0: i32, %arg1: memref<16x16xf32, #tpu.memory_space<vmem>>, %arg2: memref<16x512xbf16, #tpu.memory_space<vmem>>, %arg3: memref<1x512xf32, #tpu.memory_space<vmem>>, %arg4: memref<512x512xbf16, #tpu.memory_space<vmem>>, %arg5: memref<1x512xf32, #tpu.memory_space<vmem>>, %arg6: memref<512x512xbf16, #tpu.memory_space<vmem>>, %arg7: memref<1x512xf32, #tpu.memory_space<vmem>>, %arg8: memref<512x128xbf16, #tpu.memory_space<vmem>>, %arg9: memref<1x128xf32, #tpu.memory_space<vmem>>, %arg10: memref<16x128xf32, #tpu.memory_space<vmem>>, %arg11: memref<16x512xbf16, #tpu.memory_space<vmem>>) attributes {dimension_semantics = [#tpu.dimension_semantics<parallel>], iteration_bounds = array<i64: 1>, scalar_prefetch = 0 : i64, scratch_operands = 1 : i64, tpu.core_type = #tpu.core_type<tc>, window_params = [{transform_indices = @transform_0, window_bounds = array<i64: 16, 16>}, {pipeline_mode = #tpu.pipeline_mode<synchronous>, transform_indices = @transform_1, window_bounds = array<i64: 16, 512>}, {pipeline_mode = #tpu.pipeline_mode<synchronous>, transform_indices = @transform_2, window_bounds = array<i64: 1, 512>}, {pipeline_mode = #tpu.pipeline_mode<synchronous>, transform_indices = @transform_3, window_bounds = array<i64: 512, 512>}, {pipeline_mode = #tpu.pipeline_mode<synchronous>, transform_indices = @transform_4, window_bounds = array<i64: 1, 512>}, {pipeline_mode = #tpu.pipeline_mode<synchronous>, transform_indices = @transform_5, window_bounds = array<i64: 512, 512>}, {pipeline_mode = #tpu.pipeline_mode<synchronous>, transform_indices = @transform_6, window_bounds = array<i64: 1, 512>}, {pipeline_mode = #tpu.pipeline_mode<synchronous>, transform_indices = @transform_7, window_bounds = array<i64: 512, 128>}, {pipeline_mode = #tpu.pipeline_mode<synchronous>, transform_indices = @transform_8, window_bounds = array<i64: 1, 128>}, {transform_indices = @transform_9, window_bounds = array<i64: 16, 128>}]} {
    %c0 = arith.constant 0 : index
    %c0_0 = arith.constant 0 : index
    %0 = vector.load %arg1[%c0, %c0_0] : memref<16x16xf32, #tpu.memory_space<vmem>>, vector<16x16xf32>
    %1 = arith.truncf %0 : vector<16x16xf32> to vector<16x16xbf16>
    %c0_1 = arith.constant 0 : index
    %c0_2 = arith.constant 0 : index
    %2 = vector.load %arg2[%c0_1, %c0_2] : memref<16x512xbf16, #tpu.memory_space<vmem>>, vector<16x512xbf16>
    %cst = arith.constant dense<0.000000e+00> : vector<16x512xf32>
    %3 = tpu.matmul %1, %2, %cst {dimension_numbers = #tpu.dot_dimension_numbers<[1], [0], [0], [1], [0, 0, 1, 1], [], []>} : vector<16x16xbf16>, vector<16x512xbf16>, vector<16x512xf32> -> vector<16x512xf32>
    %c0_3 = arith.constant 0 : index
    %c0_4 = arith.constant 0 : index
    %4 = vector.load %arg3[%c0_3, %c0_4] : memref<1x512xf32, #tpu.memory_space<vmem>>, vector<1x512xf32>
    %5 = vector.broadcast %4 : vector<1x512xf32> to vector<16x512xf32>
    %6 = arith.addf %3, %5 : vector<16x512xf32>
    %cst_5 = arith.constant 0.000000e+00 : f32
    %7 = vector.broadcast %cst_5 : f32 to vector<16x512xf32>
    %8 = arith.maximumf %6, %7 : vector<16x512xf32>
    %9 = arith.truncf %8 : vector<16x512xf32> to vector<16x512xbf16>
    %c0_6 = arith.constant 0 : index
    %c0_7 = arith.constant 0 : index
    %10 = vector.load %arg11[%c0_6, %c0_7] : memref<16x512xbf16, #tpu.memory_space<vmem>>, vector<16x512xbf16>
    tpu.vector_store %arg11[%c0_6, %c0_7], %9 {strides = array<i32>} : memref<16x512xbf16, #tpu.memory_space<vmem>>, vector<16x512xbf16>,
    %c0_8 = arith.constant 0 : index
    %c0_9 = arith.constant 0 : index
    %11 = vector.load %arg11[%c0_8, %c0_9] : memref<16x512xbf16, #tpu.memory_space<vmem>>, vector<16x512xbf16>
    %c0_10 = arith.constant 0 : index
    %c0_11 = arith.constant 0 : index
    %12 = vector.load %arg4[%c0_10, %c0_11] : memref<512x512xbf16, #tpu.memory_space<vmem>>, vector<512x512xbf16>
    %cst_12 = arith.constant dense<0.000000e+00> : vector<16x512xf32>
    %13 = tpu.matmul %11, %12, %cst_12 {dimension_numbers = #tpu.dot_dimension_numbers<[1], [0], [0], [1], [0, 0, 1, 1], [], []>} : vector<16x512xbf16>, vector<512x512xbf16>, vector<16x512xf32> -> vector<16x512xf32>
    %c0_13 = arith.constant 0 : index
    %c0_14 = arith.constant 0 : index
    %14 = vector.load %arg5[%c0_13, %c0_14] : memref<1x512xf32, #tpu.memory_space<vmem>>, vector<1x512xf32>
    %15 = vector.broadcast %14 : vector<1x512xf32> to vector<16x512xf32>
    %16 = arith.addf %13, %15 : vector<16x512xf32>
    %cst_15 = arith.constant 0.000000e+00 : f32
    %17 = vector.broadcast %cst_15 : f32 to vector<16x512xf32>
    %18 = arith.maximumf %16, %17 : vector<16x512xf32>
    %19 = arith.truncf %18 : vector<16x512xf32> to vector<16x512xbf16>
    %c0_16 = arith.constant 0 : index
    %c0_17 = arith.constant 0 : index
    %20 = vector.load %arg11[%c0_16, %c0_17] : memref<16x512xbf16, #tpu.memory_space<vmem>>, vector<16x512xbf16>
    tpu.vector_store %arg11[%c0_16, %c0_17], %19 {strides = array<i32>} : memref<16x512xbf16, #tpu.memory_space<vmem>>, vector<16x512xbf16>,
    %c0_18 = arith.constant 0 : index
    %c0_19 = arith.constant 0 : index
    %21 = vector.load %arg11[%c0_18, %c0_19] : memref<16x512xbf16, #tpu.memory_space<vmem>>, vector<16x512xbf16>
    %c0_20 = arith.constant 0 : index
    %c0_21 = arith.constant 0 : index
    %22 = vector.load %arg6[%c0_20, %c0_21] : memref<512x512xbf16, #tpu.memory_space<vmem>>, vector<512x512xbf16>
    %cst_22 = arith.constant dense<0.000000e+00> : vector<16x512xf32>
    %23 = tpu.matmul %21, %22, %cst_22 {dimension_numbers = #tpu.dot_dimension_numbers<[1], [0], [0], [1], [0, 0, 1, 1], [], []>} : vector<16x512xbf16>, vector<512x512xbf16>, vector<16x512xf32> -> vector<16x512xf32>
    %c0_23 = arith.constant 0 : index
    %c0_24 = arith.constant 0 : index
    %24 = vector.load %arg7[%c0_23, %c0_24] : memref<1x512xf32, #tpu.memory_space<vmem>>, vector<1x512xf32>
    %25 = vector.broadcast %24 : vector<1x512xf32> to vector<16x512xf32>
    %26 = arith.addf %23, %25 : vector<16x512xf32>
    %cst_25 = arith.constant 0.000000e+00 : f32
    %27 = vector.broadcast %cst_25 : f32 to vector<16x512xf32>
    %28 = arith.maximumf %26, %27 : vector<16x512xf32>
    %29 = arith.truncf %28 : vector<16x512xf32> to vector<16x512xbf16>
    %c0_26 = arith.constant 0 : index
    %c0_27 = arith.constant 0 : index
    %30 = vector.load %arg11[%c0_26, %c0_27] : memref<16x512xbf16, #tpu.memory_space<vmem>>, vector<16x512xbf16>
    tpu.vector_store %arg11[%c0_26, %c0_27], %29 {strides = array<i32>} : memref<16x512xbf16, #tpu.memory_space<vmem>>, vector<16x512xbf16>,
    %c0_28 = arith.constant 0 : index
    %c0_29 = arith.constant 0 : index
    %31 = vector.load %arg11[%c0_28, %c0_29] : memref<16x512xbf16, #tpu.memory_space<vmem>>, vector<16x512xbf16>
    %c0_30 = arith.constant 0 : index
    %c0_31 = arith.constant 0 : index
    %32 = vector.load %arg8[%c0_30, %c0_31] : memref<512x128xbf16, #tpu.memory_space<vmem>>, vector<512x128xbf16>
    %cst_32 = arith.constant dense<0.000000e+00> : vector<16x128xf32>
    %33 = tpu.matmul %31, %32, %cst_32 {dimension_numbers = #tpu.dot_dimension_numbers<[1], [0], [0], [1], [0, 0, 1, 1], [], []>} : vector<16x512xbf16>, vector<512x128xbf16>, vector<16x128xf32> -> vector<16x128xf32>
    %c0_33 = arith.constant 0 : index
    %c0_34 = arith.constant 0 : index
    %34 = vector.load %arg9[%c0_33, %c0_34] : memref<1x128xf32, #tpu.memory_space<vmem>>, vector<1x128xf32>
    %35 = vector.broadcast %34 : vector<1x128xf32> to vector<16x128xf32>
    %36 = arith.addf %33, %35 : vector<16x128xf32>
    %c0_35 = arith.constant 0 : index
    %c0_36 = arith.constant 0 : index
    %37 = vector.load %arg10[%c0_35, %c0_36] : memref<16x128xf32, #tpu.memory_space<vmem>>, vector<16x128xf32>
    tpu.vector_store %arg10[%c0_35, %c0_36], %36 {strides = array<i32>} : memref<16x128xf32, #tpu.memory_space<vmem>>, vector<16x128xf32>,
    return
  }
  func.func @transform_0(%arg0: i32) -> (i32, i32) {
    %c0_i32 = arith.constant 0 : i32
    %c0_i32_0 = arith.constant 0 : i32
    return %arg0, %c0_i32 : i32, i32
  }
  func.func @transform_1(%arg0: i32) -> (i32, i32) {
    %c0_i32 = arith.constant 0 : i32
    %c0_i32_0 = arith.constant 0 : i32
    %c0_i32_1 = arith.constant 0 : i32
    return %c0_i32, %c0_i32_0 : i32, i32
  }
  func.func @transform_2(%arg0: i32) -> (i32, i32) {
    %c0_i32 = arith.constant 0 : i32
    %c0_i32_0 = arith.constant 0 : i32
    %c0_i32_1 = arith.constant 0 : i32
    return %c0_i32, %c0_i32_0 : i32, i32
  }
  func.func @transform_3(%arg0: i32) -> (i32, i32) {
    %c0_i32 = arith.constant 0 : i32
    %c0_i32_0 = arith.constant 0 : i32
    %c0_i32_1 = arith.constant 0 : i32
    return %c0_i32, %c0_i32_0 : i32, i32
  }
  func.func @transform_4(%arg0: i32) -> (i32, i32) {
    %c0_i32 = arith.constant 0 : i32
    %c0_i32_0 = arith.constant 0 : i32
    %c0_i32_1 = arith.constant 0 : i32
    return %c0_i32, %c0_i32_0 : i32, i32
  }
  func.func @transform_5(%arg0: i32) -> (i32, i32) {
    %c0_i32 = arith.constant 0 : i32
    %c0_i32_0 = arith.constant 0 : i32
    %c0_i32_1 = arith.constant 0 : i32
    return %c0_i32, %c0_i32_0 : i32, i32
  }
  func.func @transform_6(%arg0: i32) -> (i32, i32) {
    %c0_i32 = arith.constant 0 : i32
    %c0_i32_0 = arith.constant 0 : i32
    %c0_i32_1 = arith.constant 0 : i32
    return %c0_i32, %c0_i32_0 : i32, i32
  }
  func.func @transform_7(%arg0: i32) -> (i32, i32) {
    %c0_i32 = arith.constant 0 : i32
    %c0_i32_0 = arith.constant 0 : i32
    %c0_i32_1 = arith.constant 0 : i32
    return %c0_i32, %c0_i32_0 : i32, i32
  }
  func.func @transform_8(%arg0: i32) -> (i32, i32) {
    %c0_i32 = arith.constant 0 : i32
    %c0_i32_0 = arith.constant 0 : i32
    %c0_i32_1 = arith.constant 0 : i32
    return %c0_i32, %c0_i32_0 : i32, i32
  }
  func.func @transform_9(%arg0: i32) -> (i32, i32) {
    %c0_i32 = arith.constant 0 : i32
    %c0_i32_0 = arith.constant 0 : i32
    return %arg0, %c0_i32 : i32, i32
  }
}

</mosaic_0001>

<llo_original>
// kernel: policy_forward.1
$region0: #{policy_forward.1}
  #allocation0 [shape = 'u32[]', space=smem, size = 0x4, offset = 0x4, fixed_abs, tag = 'smem constant byte address 0x4 - core index']
  #allocation1 [shape = 'u32[72,128]{1,0:T(1,128)}', space=vmem, size = 0x9000, scoped, tag = 'internal scratch']
  #allocation2 [shape = 'bf16[16,512]{1,0:T(8,128)(2,1)}', space=vmem, size = 0x4000, scoped, tag = 'scratch operand']
  %s0 = inlined_call_operand.vmem [shape: f32[16,16], index: 0, kind: input, shape index: {}]
  %s1 = inlined_call_operand.hbm [shape: bf16[16,512], index: 1, kind: input, shape index: {}]
  %s2 = inlined_call_operand.vmem [shape: f32[1,512], index: 2, kind: input, shape index: {}]
  %s3 = inlined_call_operand.hbm [shape: bf16[512,512], index: 3, kind: input, shape index: {}]
  %s4 = inlined_call_operand.vmem [shape: f32[1,512], index: 4, kind: input, shape index: {}]
  %s5 = inlined_call_operand.hbm [shape: bf16[512,512], index: 5, kind: input, shape index: {}]
  %s6 = inlined_call_operand.vmem [shape: f32[1,512], index: 6, kind: input, shape index: {}]
  %s7 = inlined_call_operand.hbm [shape: bf16[512,128], index: 7, kind: input, shape index: {}]
  %s8 = inlined_call_operand.vmem [shape: f32[1,128], index: 8, kind: input, shape index: {}]
  %s9 = inlined_call_operand.vmem [shape: f32[16,128], index: 9, kind: output, shape index: {}]
  %s10 = sld [smem:[#allocation0]]
  $region62: #{policy_forward.1} parent=0
    _
  %s12 = ssub.s32 1, %s10
  %s13 = scalar_select 0, %s12, %s10
  $region1: #{policy_forward.1} parent=0
    #allocation3 [shape = 'u8[16384]{0}', space=vmem, size = 0x4000, scoped, tag = 'input window, operand 1, single buffered']
    #allocation4 [shape = 's32[1]{0}', space=sflag, size = 0x4, scoped, tag = 'scoped memory for policy_forward.1']
    #allocation5 [shape = 'u8[524288]{0}', space=vmem, size = 0x80000, scoped, tag = 'input window, operand 3, single buffered']
    #allocation6 [shape = 's32[1]{0}', space=sflag, size = 0x4, scoped, tag = 'scoped memory for policy_forward.1']
    #allocation7 [shape = 'u8[524288]{0}', space=vmem, size = 0x80000, scoped, tag = 'input window, operand 5, single buffered']
    #allocation8 [shape = 'u8[131072]{0}', space=vmem, size = 0x20000, scoped, tag = 'input window, operand 7, single buffered']
    #allocation9 [shape = 's32[1]{0}', space=sflag, size = 0x4, scoped, tag = 'scoped memory for policy_forward.1']
    %14 = vsyncpa [#allocation4], 0
    %15 = vsyncpa [#allocation6], 0
    %16 = vsyncpa [#allocation9], 0
    // Predicated region
    $region2: #{policy_forward.1} parent=1 // pred_check
      _
    $region3: #{policy_forward.1} parent=1 // pred_check_branch
      %18 = sbr.rel (0) target = $region5
    $region4: #{policy_forward.1} parent=1 // pred_region
      _
    $region5: #{policy_forward.1} parent=1 // pred_fallthru
      _
    // Predicated region
    $region6: #{policy_forward.1} parent=1 // pred_check
      _
    $region7: #{policy_forward.1} parent=1 // pred_check_branch
      %20 = sbr.rel (0) target = $region9
    $region8: #{policy_forward.1} parent=1 // pred_region
      %22 = vsyncadd [#allocation4], 0
      %s23 = sshll.u32 %s1, 4
      %s24 = int_to_ptr.hbm [resolvable:$true] %s23
      %s25 = sshll.u32 [#allocation3], 4
      %s26 = int_to_ptr.vmem [resolvable:$true] %s25
      %31 = dma.hbm_to_vmem [thread:$0]  %s24, 512, %s26, [#allocation4], 256, 256, 16
    $region9: #{policy_forward.1} parent=1 // pred_fallthru
      _
    // Predicated region
    $region10: #{policy_forward.1} parent=1 // pred_check
      _
    $region11: #{policy_forward.1} parent=1 // pred_check_branch
      %33 = sbr.rel (0) target = $region13
    $region12: #{policy_forward.1} parent=1 // pred_region
      _
    $region13: #{policy_forward.1} parent=1 // pred_fallthru
      _
    // Predicated region
    $region14: #{policy_forward.1} parent=1 // pred_check
      _
    $region15: #{policy_forward.1} parent=1 // pred_check_branch
      %35 = sbr.rel (0) target = $region17
    $region16: #{policy_forward.1} parent=1 // pred_region
      %37 = vsyncadd [#allocation6], 0
      %s38 = sshll.u32 %s3, 4
      %s39 = int_to_ptr.hbm [resolvable:$true] %s38
      %s40 = sshll.u32 [#allocation5], 4
      %s41 = int_to_ptr.vmem [resolvable:$true] %s40
      %46 = dma.hbm_to_vmem [thread:$0]  %s39, 16384, %s41, [#allocation6], 256, 256, 16
    $region17: #{policy_forward.1} parent=1 // pred_fallthru
      _
    // Predicated region
    $region18: #{policy_forward.1} parent=1 // pred_check
      _
    $region19: #{policy_forward.1} parent=1 // pred_check_branch
      %48 = sbr.rel (0) target = $region21
    $region20: #{policy_forward.1} parent=1 // pred_region
      _
    $region21: #{policy_forward.1} parent=1 // pred_fallthru
      _
    // Predicated region
    $region22: #{policy_forward.1} parent=1 // pred_check
      _
    $region23: #{policy_forward.1} parent=1 // pred_check_branch
      %50 = sbr.rel (0) target = $region25
    $region24: #{policy_forward.1} parent=1 // pred_region
      %52 = vsyncadd [#allocation6], 0
      %s53 = sshll.u32 %s5, 4
      %s54 = int_to_ptr.hbm [resolvable:$true] %s53
      %s55 = sshll.u32 [#allocation7], 4
      %s56 = int_to_ptr.vmem [resolvable:$true] %s55
      %61 = dma.hbm_to_vmem [thread:$0]  %s54, 16384, %s56, [#allocation6], 256, 256, 16
    $region25: #{policy_forward.1} parent=1 // pred_fallthru
      _
    // Predicated region
    $region26: #{policy_forward.1} parent=1 // pred_check
      _
    $region27: #{policy_forward.1} parent=1 // pred_check_branch
      %63 = sbr.rel (0) target = $region29
    $region28: #{policy_forward.1} parent=1 // pred_region
      _
    $region29: #{policy_forward.1} parent=1 // pred_fallthru
      _
    // Predicated region
    $region30: #{policy_forward.1} parent=1 // pred_check
      _
    $region31: #{policy_forward.1} parent=1 // pred_check_branch
      %65 = sbr.rel (0) target = $region33
    $region32: #{policy_forward.1} parent=1 // pred_region
      %67 = vsyncadd [#allocation9], 0
      %s68 = sshll.u32 %s7, 4
      %s69 = int_to_ptr.hbm [resolvable:$true] %s68
      %s70 = sshll.u32 [#allocation8], 4
      %s71 = int_to_ptr.vmem [resolvable:$true] %s70
      %76 = dma.hbm_to_vmem [thread:$0]  %s69, 4096, %s71, [#allocation9], 64, 64, 4
    $region33: #{policy_forward.1} parent=1 // pred_fallthru
      _
    // Predicated region
    $region34: #{policy_forward.1} parent=1 // pred_check
      _
    $region35: #{policy_forward.1} parent=1 // pred_check_branch
      %78 = sbr.rel (0) target = $region37
    $region36: #{policy_forward.1} parent=1 // pred_region
      _
    $region37: #{policy_forward.1} parent=1 // pred_fallthru
      _
    // Predicated region
    $region38: #{policy_forward.1} parent=1 // pred_check
      _
    $region39: #{policy_forward.1} parent=1 // pred_check_branch
      %80 = sbr.rel (0) target = $region41
    $region40: #{policy_forward.1} parent=1 // pred_region
      %82 = dma.done [#allocation4], 512
    $region41: #{policy_forward.1} parent=1 // pred_fallthru
      _
    // Predicated region
    $region42: #{policy_forward.1} parent=1 // pred_check
      _
    $region43: #{policy_forward.1} parent=1 // pred_check_branch
      %84 = sbr.rel (0) target = $region45
    $region44: #{policy_forward.1} parent=1 // pred_region
      %86 = dma.done [#allocation6], 16384
    $region45: #{policy_forward.1} parent=1 // pred_fallthru
      _
    // Predicated region
    $region46: #{policy_forward.1} parent=1 // pred_check
      _
    $region47: #{policy_forward.1} parent=1 // pred_check_branch
      %88 = sbr.rel (0) target = $region49
    $region48: #{policy_forward.1} parent=1 // pred_region
      %90 = dma.done [#allocation6], 16384
    $region49: #{policy_forward.1} parent=1 // pred_fallthru
      _
    // Predicated region
    $region50: #{policy_forward.1} parent=1 // pred_check
      _
    $region51: #{policy_forward.1} parent=1 // pred_check_branch
      %92 = sbr.rel (0) target = $region53
    $region52: #{policy_forward.1} parent=1 // pred_region
      %94 = dma.done [#allocation9], 4096
    $region53: #{policy_forward.1} parent=1 // pred_fallthru
      _
    %v96 = vld [vmem:[%s0] sm:$0xff]
    %v97 = vld [vmem:[%s0 + $0x8] sm:$0xff]
    %v98 = vpack.c.bf16 %v97, %v96
    %v99 = vld [vmem:[#allocation3] sm:$0xff]
    %v100 = vld [vmem:[#allocation3 + $0x8] sm:$0xff]
    %v101 = vld [vmem:[#allocation3 + $0x10] sm:$0xff]
    %v102 = vld [vmem:[#allocation3 + $0x18] sm:$0xff]
    %v103 = vld [vmem:[%s2] sm:$0xf]
    %v105 = vperm.slane %v103, 0
    %v106 = vperm.slane %v103, 1
    %v107 = vperm.slane %v103, 2
    %v108 = vperm.slane %v103, 3
    %v117 = vunpack.c.l.b16 %v99
    %v118 = vunpack.c.h.b16 %v99
    %v119 = vunpack.c.l.b16 %v100
    %v120 = vunpack.c.h.b16 %v100
    %v121 = vunpack.c.l.b16 %v101
    %v122 = vunpack.c.h.b16 %v101
    %v123 = vunpack.c.l.b16 %v102
    %v124 = vunpack.c.h.b16 %v102
    %v125 = vpack.c.b16 %v121, %v117
    %v126 = vpack.c.b16 %v122, %v118
    %v127 = vpack.c.b16 %v123, %v119
    %v128 = vpack.c.b16 %v124, %v120
    %vm133 = vcmask 130048
    %v135 = vsel %vm133, %v98, 0
    %137 = vmatpush.bf16.msra.mxu0 0
    %138 = vmatpush.bf16.msra.mxu0 0
    %139 = vmatpush.bf16.msra.mxu0 0
    %140 = vmatpush.bf16.msra.mxu0 0
    %141 = vmatpush.bf16.msra.mxu0 0
    %142 = vmatpush.bf16.msra.mxu0 0
    %143 = vmatpush.bf16.msra.mxu0 0
    %144 = vmatpush.bf16.msra.mxu0 %v125
    %145 = vmatmul.bf16.gmra.mxu0 %v135
    %v146 = vpop.f32.mrf.mxu0
    %v147 = vadd.f32 %v105, %v146
    %v148 = vpop.f32.mrf.mxu0
    %v149 = vadd.f32 %v105, %v148
    %150 = vdwg.mxu0
    %151 = vmatpush.bf16.msra.mxu0 0
    %152 = vmatpush.bf16.msra.mxu0 0
    %153 = vmatpush.bf16.msra.mxu0 0
    %154 = vmatpush.bf16.msra.mxu0 0
    %155 = vmatpush.bf16.msra.mxu0 0
    %156 = vmatpush.bf16.msra.mxu0 0
    %157 = vmatpush.bf16.msra.mxu0 0
    %158 = vmatpush.bf16.msra.mxu0 %v126
    %159 = vmatmul.bf16.gmra.mxu0 %v135
    %v160 = vpop.f32.mrf.mxu0
    %v161 = vadd.f32 %v106, %v160
    %v162 = vpop.f32.mrf.mxu0
    %v163 = vadd.f32 %v106, %v162
    %164 = vdwg.mxu0
    %165 = vmatpush.bf16.msra.mxu0 0
    %166 = vmatpush.bf16.msra.mxu0 0
    %167 = vmatpush.bf16.msra.mxu0 0
    %168 = vmatpush.bf16.msra.mxu0 0
    %169 = vmatpush.bf16.msra.mxu0 0
    %170 = vmatpush.bf16.msra.mxu0 0
    %171 = vmatpush.bf16.msra.mxu0 0
    %172 = vmatpush.bf16.msra.mxu0 %v127
    %173 = vmatmul.bf16.gmra.mxu0 %v135
    %v174 = vpop.f32.mrf.mxu0
    %v175 = vadd.f32 %v107, %v174
    %v176 = vpop.f32.mrf.mxu0
    %v177 = vadd.f32 %v107, %v176
    %178 = vdwg.mxu0
    %179 = vmatpush.bf16.msra.mxu0 0
    %180 = vmatpush.bf16.msra.mxu0 0
    %181 = vmatpush.bf16.msra.mxu0 0
    %182 = vmatpush.bf16.msra.mxu0 0
    %183 = vmatpush.bf16.msra.mxu0 0
    %184 = vmatpush.bf16.msra.mxu0 0
    %185 = vmatpush.bf16.msra.mxu0 0
    %186 = vmatpush.bf16.msra.mxu0 %v128
    %187 = vmatmul.bf16.gmra.mxu0 %v135
    %v188 = vpop.f32.mrf.mxu0
    %v189 = vadd.f32 %v108, %v188
    %v190 = vpop.f32.mrf.mxu0
    %v191 = vadd.f32 %v108, %v190
    %192 = vdwg.mxu0
    %v193 = vmax.f32 %v147, 0.0
    %v194 = vmax.f32 %v161, 0.0
    %v195 = vmax.f32 %v175, 0.0
    %v196 = vmax.f32 %v189, 0.0
    %v197 = vmax.f32 %v149, 0.0
    %v198 = vmax.f32 %v163, 0.0
    %v199 = vmax.f32 %v177, 0.0
    %v200 = vmax.f32 %v191, 0.0
    %v201 = vpack.c.bf16 %v194, %v193
    %v202 = vpack.c.bf16 %v196, %v195
    %v203 = vpack.c.bf16 %v198, %v197
    %v204 = vpack.c.bf16 %v200, %v199
    %205 = vst [vmem:[#allocation2] sm:$0xff] %v201
    %206 = vst [vmem:[#allocation2 + $0x8] sm:$0xff] %v202
    %207 = vst [vmem:[#allocation2 + $0x10] sm:$0xff] %v203
    %208 = vst [vmem:[#allocation2 + $0x18] sm:$0xff] %v204
    %v209 = vld [vmem:[#allocation2] sm:$0xff]
    %v210 = vld [vmem:[#allocation2 + $0x8] sm:$0xff]
    %v211 = vld [vmem:[#allocation2 + $0x10] sm:$0xff]
    %v212 = vld [vmem:[#allocation2 + $0x18] sm:$0xff]
    %v213 = vld [vmem:[#allocation5] sm:$0xff]
    %v214 = vld [vmem:[#allocation5 + $0x8] sm:$0xff]
    %v215 = vld [vmem:[#allocation5 + $0x10] sm:$0xff]
    %v216 = vld [vmem:[#allocation5 + $0x18] sm:$0xff]
    %v217 = vld [vmem:[#allocation5 + $0x20] sm:$0xff]
    %v218 = vld [vmem:[#allocation5 + $0x28] sm:$0xff]
    %v219 = vld [vmem:[#allocation5 + $0x30] sm:$0xff]
    %v220 = vld [vmem:[#allocation5 + $0x38] sm:$0xff]
    %v221 = vld [vmem:[#allocation5 + $0x40] sm:$0xff]
    %v222 = vld [vmem:[#allocation5 + $0x48] sm:$0xff]
    %v223 = vld [vmem:[#allocation5 + $0x50] sm:$0xff]
    %v224 = vld [vmem:[#allocation5 + $0x58] sm:$0xff]
    %v225 = vld [vmem:[#allocation5 + $0x60] sm:$0xff]
    %v226 = vld [vmem:[#allocation5 + $0x68] sm:$0xff]
    %v227 = vld [vmem:[#allocation5 + $0x70] sm:$0xff]
    %v228 = vld [vmem:[#allocation5 + $0x78] sm:$0xff]
    %v229 = vld [vmem:[#allocation5 + $0x80] sm:$0xff]
    %v230 = vld [vmem:[#allocation5 + $0x88] sm:$0xff]
    %v231 = vld [vmem:[#allocation5 + $0x90] sm:$0xff]
    %v232 = vld [vmem:[#allocation5 + $0x98] sm:$0xff]
    %v233 = vld [vmem:[#allocation5 + $0xa0] sm:$0xff]
    %v234 = vld [vmem:[#allocation5 + $0xa8] sm:$0xff]
    %v235 = vld [vmem:[#allocation5 + $0xb0] sm:$0xff]
    %v236 = vld [vmem:[#allocation5 + $0xb8] sm:$0xff]
    %v237 = vld [vmem:[#allocation5 + $0xc0] sm:$0xff]
    %v238 = vld [vmem:[#allocation5 + $0xc8] sm:$0xff]
    %v239 = vld [vmem:[#allocation5 + $0xd0] sm:$0xff]
    %v240 = vld [vmem:[#allocation5 + $0xd8] sm:$0xff]
    %v241 = vld [vmem:[#allocation5 + $0xe0] sm:$0xff]
    %v242 = vld [vmem:[#allocation5 + $0xe8] sm:$0xff]
    %v243 = vld [vmem:[#allocation5 + $0xf0] sm:$0xff]
    %v244 = vld [vmem:[#allocation5 + $0xf8] sm:$0xff]
    %v245 = vld [vmem:[#allocation5 + $0x100] sm:$0xff]
    %v246 = vld [vmem:[#allocation5 + $0x108] sm:$0xff]
    %v247 = vld [vmem:[#allocation5 + $0x110] sm:$0xff]
    %v248 = vld [vmem:[#allocation5 + $0x118] sm:$0xff]
    %v249 = vld [vmem:[#allocation5 + $0x120] sm:$0xff]
    %v250 = vld [vmem:[#allocation5 + $0x128] sm:$0xff]
    %v251 = vld [vmem:[#allocation5 + $0x130] sm:$0xff]
    %v252 = vld [vmem:[#allocation5 + $0x138] sm:$0xff]
    %v253 = vld [vmem:[#allocation5 + $0x140] sm:$0xff]
    %v254 = vld [vmem:[#allocation5 + $0x148] sm:$0xff]
    %v255 = vld [vmem:[#allocation5 + $0x150] sm:$0xff]
    %v256 = vld [vmem:[#allocation5 + $0x158] sm:$0xff]
    %v257 = vld [vmem:[#allocation5 + $0x160] sm:$0xff]
    %v258 = vld [vmem:[#allocation5 + $0x168] sm:$0xff]
    %v259 = vld [vmem:[#allocation5 + $0x170] sm:$0xff]
    %v260 = vld [vmem:[#allocation5 + $0x178] sm:$0xff]
    %v261 = vld [vmem:[#allocation5 + $0x180] sm:$0xff]
    %v262 = vld [vmem:[#allocation5 + $0x188] sm:$0xff]
    %v263 = vld [vmem:[#allocation5 + $0x190] sm:$0xff]
    %v264 = vld [vmem:[#allocation5 + $0x198] sm:$0xff]
    %v265 = vld [vmem:[#allocation5 + $0x1a0] sm:$0xff]
    %v266 = vld [vmem:[#allocation5 + $0x1a8] sm:$0xff]
    %v267 = vld [vmem:[#allocation5 + $0x1b0] sm:$0xff]
    %v268 = vld [vmem:[#allocation5 + $0x1b8] sm:$0xff]
    %v269 = vld [vmem:[#allocation5 + $0x1c0] sm:$0xff]
    %v270 = vld [vmem:[#allocation5 + $0x1c8] sm:$0xff]
    %v271 = vld [vmem:[#allocation5 + $0x1d0] sm:$0xff]
    %v272 = vld [vmem:[#allocation5 + $0x1d8] sm:$0xff]
    %v273 = vld [vmem:[#allocation5 + $0x1e0] sm:$0xff]
    %v274 = vld [vmem:[#allocation5 + $0x1e8] sm:$0xff]
    %v275 = vld [vmem:[#allocation5 + $0x1f0] sm:$0xff]
    %v276 = vld [vmem:[#allocation5 + $0x1f8] sm:$0xff]
    %v277 = vld [vmem:[#allocation5 + $0x200] sm:$0xff]
    %v278 = vld [vmem:[#allocation5 + $0x208] sm:$0xff]
    %v279 = vld [vmem:[#allocation5 + $0x210] sm:$0xff]
    %v280 = vld [vmem:[#allocation5 + $0x218] sm:$0xff]
    %v281 = vld [vmem:[#allocation5 + $0x220] sm:$0xff]
    %v282 = vld [vmem:[#allocation5 + $0x228] sm:$0xff]
    %v283 = vld [vmem:[#allocation5 + $0x230] sm:$0xff]
    %v284 = vld [vmem:[#allocation5 + $0x238] sm:$0xff]
    %v285 = vld [vmem:[#allocation5 + $0x240] sm:$0xff]
    %v286 = vld [vmem:[#allocation5 + $0x248] sm:$0xff]
    %v287 = vld [vmem:[#allocation5 + $0x250] sm:$0xff]
    %v288 = vld [vmem:[#allocation5 + $0x258] sm:$0xff]
    %v289 = vld [vmem:[#allocation5 + $0x260] sm:$0xff]
    %v290 = vld [vmem:[#allocation5 + $0x268] sm:$0xff]
    %v291 = vld [vmem:[#allocation5 + $0x270] sm:$0xff]
    %v292 = vld [vmem:[#allocation5 + $0x278] sm:$0xff]
    %v293 = vld [vmem:[#allocation5 + $0x280] sm:$0xff]
    %v294 = vld [vmem:[#allocation5 + $0x288] sm:$0xff]
    %v295 = vld [vmem:[#allocation5 + $0x290] sm:$0xff]
    %v296 = vld [vmem:[#allocation5 + $0x298] sm:$0xff]
    %v297 = vld [vmem:[#allocation5 + $0x2a0] sm:$0xff]
    %v298 = vld [vmem:[#allocation5 + $0x2a8] sm:$0xff]
    %v299 = vld [vmem:[#allocation5 + $0x2b0] sm:$0xff]
    %v300 = vld [vmem:[#allocation5 + $0x2b8] sm:$0xff]
    %v301 = vld [vmem:[#allocation5 + $0x2c0] sm:$0xff]
    %v302 = vld [vmem:[#allocation5 + $0x2c8] sm:$0xff]
    %v303 = vld [vmem:[#allocation5 + $0x2d0] sm:$0xff]
    %v304 = vld [vmem:[#allocation5 + $0x2d8] sm:$0xff]
    %v305 = vld [vmem:[#allocation5 + $0x2e0] sm:$0xff]
    %v306 = vld [vmem:[#allocation5 + $0x2e8] sm:$0xff]
    %v307 = vld [vmem:[#allocation5 + $0x2f0] sm:$0xff]
    %v308 = vld [vmem:[#allocation5 + $0x2f8] sm:$0xff]
    %v309 = vld [vmem:[#allocation5 + $0x300] sm:$0xff]
    %v310 = vld [vmem:[#allocation5 + $0x308] sm:$0xff]
    %v311 = vld [vmem:[#allocation5 + $0x310] sm:$0xff]
    %v312 = vld [vmem:[#allocation5 + $0x318] sm:$0xff]
    %v313 = vld [vmem:[#allocation5 + $0x320] sm:$0xff]
    %v314 = vld [vmem:[#allocation5 + $0x328] sm:$0xff]
    %v315 = vld [vmem:[#allocation5 + $0x330] sm:$0xff]
    %v316 = vld [vmem:[#allocation5 + $0x338] sm:$0xff]
    %v317 = vld [vmem:[#allocation5 + $0x340] sm:$0xff]
    %v318 = vld [vmem:[#allocation5 + $0x348] sm:$0xff]
    %v319 = vld [vmem:[#allocation5 + $0x350] sm:$0xff]
    %v320 = vld [vmem:[#allocation5 + $0x358] sm:$0xff]
    %v321 = vld [vmem:[#allocation5 + $0x360] sm:$0xff]
    %v322 = vld [vmem:[#allocation5 + $0x368] sm:$0xff]
    %v323 = vld [vmem:[#allocation5 + $0x370] sm:$0xff]
    %v324 = vld [vmem:[#allocation5 + $0x378] sm:$0xff]
    %v325 = vld [vmem:[#allocation5 + $0x380] sm:$0xff]
    %v326 = vld [vmem:[#allocation5 + $0x388] sm:$0xff]
    %v327 = vld [vmem:[#allocation5 + $0x390] sm:$0xff]
    %v328 = vld [vmem:[#allocation5 + $0x398] sm:$0xff]
    %v329 = vld [vmem:[#allocation5 + $0x3a0] sm:$0xff]
    %v330 = vld [vmem:[#allocation5 + $0x3a8] sm:$0xff]
    %v331 = vld [vmem:[#allocation5 + $0x3b0] sm:$0xff]
    %v332 = vld [vmem:[#allocation5 + $0x3b8] sm:$0xff]
    %v333 = vld [vmem:[#allocation5 + $0x3c0] sm:$0xff]
    %v334 = vld [vmem:[#allocation5 + $0x3c8] sm:$0xff]
    %v335 = vld [vmem:[#allocation5 + $0x3d0] sm:$0xff]
    %v336 = vld [vmem:[#allocation5 + $0x3d8] sm:$0xff]
    %v337 = vld [vmem:[#allocation5 + $0x3e0] sm:$0xff]
    %v338 = vld [vmem:[#allocation5 + $0x3e8] sm:$0xff]
    %v339 = vld [vmem:[#allocation5 + $0x3f0] sm:$0xff]
    %v340 = vld [vmem:[#allocation5 + $0x3f8] sm:$0xff]
    %v341 = vld [vmem:[%s4] sm:$0xf]
    %v343 = vperm.slane %v341, 0
    %v344 = vperm.slane %v341, 1
    %v345 = vperm.slane %v341, 2
    %v346 = vperm.slane %v341, 3
    %v355 = vunpack.c.l.b16 %v209
    %v356 = vunpack.c.h.b16 %v209
    %v357 = vunpack.c.l.b16 %v210
    %v358 = vunpack.c.h.b16 %v210
    %v359 = vunpack.c.l.b16 %v211
    %v360 = vunpack.c.h.b16 %v211
    %v361 = vunpack.c.l.b16 %v212
    %v362 = vunpack.c.h.b16 %v212
    %v363 = vpack.c.b16 %v359, %v355
    %v364 = vpack.c.b16 %v360, %v356
    %v365 = vpack.c.b16 %v361, %v357
    %v366 = vpack.c.b16 %v362, %v358
    %v499 = vunpack.c.l.b16 %v213
    %v500 = vunpack.c.h.b16 %v213
    %v501 = vunpack.c.l.b16 %v214
    %v502 = vunpack.c.h.b16 %v214
    %v503 = vunpack.c.l.b16 %v215
    %v504 = vunpack.c.h.b16 %v215
    %v505 = vunpack.c.l.b16 %v216
    %v506 = vunpack.c.h.b16 %v216
    %v507 = vunpack.c.l.b16 %v217
    %v508 = vunpack.c.h.b16 %v217
    %v509 = vunpack.c.l.b16 %v218
    %v510 = vunpack.c.h.b16 %v218
    %v511 = vunpack.c.l.b16 %v219
    %v512 = vunpack.c.h.b16 %v219
    %v513 = vunpack.c.l.b16 %v220
    %v514 = vunpack.c.h.b16 %v220
    %v515 = vunpack.c.l.b16 %v221
    %v516 = vunpack.c.h.b16 %v221
    %v517 = vunpack.c.l.b16 %v222
    %v518 = vunpack.c.h.b16 %v222
    %v519 = vunpack.c.l.b16 %v223
    %v520 = vunpack.c.h.b16 %v223
    %v521 = vunpack.c.l.b16 %v224
    %v522 = vunpack.c.h.b16 %v224
    %v523 = vunpack.c.l.b16 %v225
    %v524 = vunpack.c.h.b16 %v225
    %v525 = vunpack.c.l.b16 %v226
    %v526 = vunpack.c.h.b16 %v226
    %v527 = vunpack.c.l.b16 %v227
    %v528 = vunpack.c.h.b16 %v227
    %v529 = vunpack.c.l.b16 %v228
    %v530 = vunpack.c.h.b16 %v228
    %v531 = vunpack.c.l.b16 %v229
    %v532 = vunpack.c.h.b16 %v229
    %v533 = vunpack.c.l.b16 %v230
    %v534 = vunpack.c.h.b16 %v230
    %v535 = vunpack.c.l.b16 %v231
    %v536 = vunpack.c.h.b16 %v231
    %v537 = vunpack.c.l.b16 %v232
    %v538 = vunpack.c.h.b16 %v232
    %v539 = vunpack.c.l.b16 %v233
    %v540 = vunpack.c.h.b16 %v233
    %v541 = vunpack.c.l.b16 %v234
    %v542 = vunpack.c.h.b16 %v234
    %v543 = vunpack.c.l.b16 %v235
    %v544 = vunpack.c.h.b16 %v235
    %v545 = vunpack.c.l.b16 %v236
    %v546 = vunpack.c.h.b16 %v236
    %v547 = vunpack.c.l.b16 %v237
    %v548 = vunpack.c.h.b16 %v237
    %v549 = vunpack.c.l.b16 %v238
    %v550 = vunpack.c.h.b16 %v238
    %v551 = vunpack.c.l.b16 %v239
    %v552 = vunpack.c.h.b16 %v239
    %v553 = vunpack.c.l.b16 %v240
    %v554 = vunpack.c.h.b16 %v240
    %v555 = vunpack.c.l.b16 %v241
    %v556 = vunpack.c.h.b16 %v241
    %v557 = vunpack.c.l.b16 %v242
    %v558 = vunpack.c.h.b16 %v242
    %v559 = vunpack.c.l.b16 %v243
    %v560 = vunpack.c.h.b16 %v243
    %v561 = vunpack.c.l.b16 %v244
    %v562 = vunpack.c.h.b16 %v244
    %v563 = vunpack.c.l.b16 %v245
    %v564 = vunpack.c.h.b16 %v245
    %v565 = vunpack.c.l.b16 %v246
    %v566 = vunpack.c.h.b16 %v246
    %v567 = vunpack.c.l.b16 %v247
    %v568 = vunpack.c.h.b16 %v247
    %v569 = vunpack.c.l.b16 %v248
    %v570 = vunpack.c.h.b16 %v248
    %v571 = vunpack.c.l.b16 %v249
    %v572 = vunpack.c.h.b16 %v249
    %v573 = vunpack.c.l.b16 %v250
    %v574 = vunpack.c.h.b16 %v250
    %v575 = vunpack.c.l.b16 %v251
    %v576 = vunpack.c.h.b16 %v251
    %v577 = vunpack.c.l.b16 %v252
    %v578 = vunpack.c.h.b16 %v252
    %v579 = vunpack.c.l.b16 %v253
    %v580 = vunpack.c.h.b16 %v253
    %v581 = vunpack.c.l.b16 %v254
    %v582 = vunpack.c.h.b16 %v254
    %v583 = vunpack.c.l.b16 %v255
    %v584 = vunpack.c.h.b16 %v255
    %v585 = vunpack.c.l.b16 %v256
    %v586 = vunpack.c.h.b16 %v256
    %v587 = vunpack.c.l.b16 %v257
    %v588 = vunpack.c.h.b16 %v257
    %v589 = vunpack.c.l.b16 %v258
    %v590 = vunpack.c.h.b16 %v258
    %v591 = vunpack.c.l.b16 %v259
    %v592 = vunpack.c.h.b16 %v259
    %v593 = vunpack.c.l.b16 %v260
    %v594 = vunpack.c.h.b16 %v260
    %v595 = vunpack.c.l.b16 %v261
    %v596 = vunpack.c.h.b16 %v261
    %v597 = vunpack.c.l.b16 %v262
    %v598 = vunpack.c.h.b16 %v262
    %v599 = vunpack.c.l.b16 %v263
    %v600 = vunpack.c.h.b16 %v263
    %v601 = vunpack.c.l.b16 %v264
    %v602 = vunpack.c.h.b16 %v264
    %v603 = vunpack.c.l.b16 %v265
    %v604 = vunpack.c.h.b16 %v265
    %v605 = vunpack.c.l.b16 %v266
    %v606 = vunpack.c.h.b16 %v266
    %v607 = vunpack.c.l.b16 %v267
    %v608 = vunpack.c.h.b16 %v267
    %v609 = vunpack.c.l.b16 %v268
    %v610 = vunpack.c.h.b16 %v268
    %v611 = vunpack.c.l.b16 %v269
    %v612 = vunpack.c.h.b16 %v269
    %v613 = vunpack.c.l.b16 %v270
    %v614 = vunpack.c.h.b16 %v270
    %v615 = vunpack.c.l.b16 %v271
    %v616 = vunpack.c.h.b16 %v271
    %v617 = vunpack.c.l.b16 %v272
    %v618 = vunpack.c.h.b16 %v272
    %v619 = vunpack.c.l.b16 %v273
    %v620 = vunpack.c.h.b16 %v273
    %v621 = vunpack.c.l.b16 %v274
    %v622 = vunpack.c.h.b16 %v274
    %v623 = vunpack.c.l.b16 %v275
    %v624 = vunpack.c.h.b16 %v275
    %v625 = vunpack.c.l.b16 %v276
    %v626 = vunpack.c.h.b16 %v276
    %v627 = vunpack.c.l.b16 %v277
    %v628 = vunpack.c.h.b16 %v277
    %v629 = vunpack.c.l.b16 %v278
    %v630 = vunpack.c.h.b16 %v278
    %v631 = vunpack.c.l.b16 %v279
    %v632 = vunpack.c.h.b16 %v279
    %v633 = vunpack.c.l.b16 %v280
    %v634 = vunpack.c.h.b16 %v280
    %v635 = vunpack.c.l.b16 %v281
    %v636 = vunpack.c.h.b16 %v281
    %v637 = vunpack.c.l.b16 %v282
    %v638 = vunpack.c.h.b16 %v282
    %v639 = vunpack.c.l.b16 %v283
    %v640 = vunpack.c.h.b16 %v283
    %v641 = vunpack.c.l.b16 %v284
    %v642 = vunpack.c.h.b16 %v284
    %v643 = vunpack.c.l.b16 %v285
    %v644 = vunpack.c.h.b16 %v285
    %v645 = vunpack.c.l.b16 %v286
    %v646 = vunpack.c.h.b16 %v286
    %v647 = vunpack.c.l.b16 %v287
    %v648 = vunpack.c.h.b16 %v287
    %v649 = vunpack.c.l.b16 %v288
    %v650 = vunpack.c.h.b16 %v288
    %v651 = vunpack.c.l.b16 %v289
    %v652 = vunpack.c.h.b16 %v289
    %v653 = vunpack.c.l.b16 %v290
    %v654 = vunpack.c.h.b16 %v290
    %v655 = vunpack.c.l.b16 %v291
    %v656 = vunpack.c.h.b16 %v291
    %v657 = vunpack.c.l.b16 %v292
    %v658 = vunpack.c.h.b16 %v292
    %v659 = vunpack.c.l.b16 %v293
    %v660 = vunpack.c.h.b16 %v293
    %v661 = vunpack.c.l.b16 %v294
    %v662 = vunpack.c.h.b16 %v294
    %v663 = vunpack.c.l.b16 %v295
    %v664 = vunpack.c.h.b16 %v295
    %v665 = vunpack.c.l.b16 %v296
    %v666 = vunpack.c.h.b16 %v296
    %v667 = vunpack.c.l.b16 %v297
    %v668 = vunpack.c.h.b16 %v297
    %v669 = vunpack.c.l.b16 %v298
    %v670 = vunpack.c.h.b16 %v298
    %v671 = vunpack.c.l.b16 %v299
    %v672 = vunpack.c.h.b16 %v299
    %v673 = vunpack.c.l.b16 %v300
    %v674 = vunpack.c.h.b16 %v300
    %v675 = vunpack.c.l.b16 %v301
    %v676 = vunpack.c.h.b16 %v301
    %v677 = vunpack.c.l.b16 %v302
    %v678 = vunpack.c.h.b16 %v302
    %v679 = vunpack.c.l.b16 %v303
    %v680 = vunpack.c.h.b16 %v303
    %v681 = vunpack.c.l.b16 %v304
    %v682 = vunpack.c.h.b16 %v304
    %v683 = vunpack.c.l.b16 %v305
    %v684 = vunpack.c.h.b16 %v305
    %v685 = vunpack.c.l.b16 %v306
    %v686 = vunpack.c.h.b16 %v306
    %v687 = vunpack.c.l.b16 %v307
    %v688 = vunpack.c.h.b16 %v307
    %v689 = vunpack.c.l.b16 %v308
    %v690 = vunpack.c.h.b16 %v308
    %v691 = vunpack.c.l.b16 %v309
    %v692 = vunpack.c.h.b16 %v309
    %v693 = vunpack.c.l.b16 %v310
    %v694 = vunpack.c.h.b16 %v310
    %v695 = vunpack.c.l.b16 %v311
    %v696 = vunpack.c.h.b16 %v311
    %v697 = vunpack.c.l.b16 %v312
    %v698 = vunpack.c.h.b16 %v312
    %v699 = vunpack.c.l.b16 %v313
    %v700 = vunpack.c.h.b16 %v313
    %v701 = vunpack.c.l.b16 %v314
    %v702 = vunpack.c.h.b16 %v314
    %v703 = vunpack.c.l.b16 %v315
    %v704 = vunpack.c.h.b16 %v315
    %v705 = vunpack.c.l.b16 %v316
    %v706 = vunpack.c.h.b16 %v316
    %v707 = vunpack.c.l.b16 %v317
    %v708 = vunpack.c.h.b16 %v317
    %v709 = vunpack.c.l.b16 %v318
    %v710 = vunpack.c.h.b16 %v318
    %v711 = vunpack.c.l.b16 %v319
    %v712 = vunpack.c.h.b16 %v319
    %v713 = vunpack.c.l.b16 %v320
    %v714 = vunpack.c.h.b16 %v320
    %v715 = vunpack.c.l.b16 %v321
    %v716 = vunpack.c.h.b16 %v321
    %v717 = vunpack.c.l.b16 %v322
    %v718 = vunpack.c.h.b16 %v322
    %v719 = vunpack.c.l.b16 %v323
    %v720 = vunpack.c.h.b16 %v323
    %v721 = vunpack.c.l.b16 %v324
    %v722 = vunpack.c.h.b16 %v324
    %v723 = vunpack.c.l.b16 %v325
    %v724 = vunpack.c.h.b16 %v325
    %v725 = vunpack.c.l.b16 %v326
    %v726 = vunpack.c.h.b16 %v326
    %v727 = vunpack.c.l.b16 %v327
    %v728 = vunpack.c.h.b16 %v327
    %v729 = vunpack.c.l.b16 %v328
    %v730 = vunpack.c.h.b16 %v328
    %v731 = vunpack.c.l.b16 %v329
    %v732 = vunpack.c.h.b16 %v329
    %v733 = vunpack.c.l.b16 %v330
    %v734 = vunpack.c.h.b16 %v330
    %v735 = vunpack.c.l.b16 %v331
    %v736 = vunpack.c.h.b16 %v331
    %v737 = vunpack.c.l.b16 %v332
    %v738 = vunpack.c.h.b16 %v332
    %v739 = vunpack.c.l.b16 %v333
    %v740 = vunpack.c.h.b16 %v333
    %v741 = vunpack.c.l.b16 %v334
    %v742 = vunpack.c.h.b16 %v334
    %v743 = vunpack.c.l.b16 %v335
    %v744 = vunpack.c.h.b16 %v335
    %v745 = vunpack.c.l.b16 %v336
    %v746 = vunpack.c.h.b16 %v336
    %v747 = vunpack.c.l.b16 %v337
    %v748 = vunpack.c.h.b16 %v337
    %v749 = vunpack.c.l.b16 %v338
    %v750 = vunpack.c.h.b16 %v338
    %v751 = vunpack.c.l.b16 %v339
    %v752 = vunpack.c.h.b16 %v339
    %v753 = vunpack.c.l.b16 %v340
    %v754 = vunpack.c.h.b16 %v340
    %v755 = vpack.c.b16 %v503, %v499
    %v756 = vpack.c.b16 %v504, %v500
    %v757 = vpack.c.b16 %v505, %v501
    %v758 = vpack.c.b16 %v506, %v502
    %v759 = vpack.c.b16 %v511, %v507
    %v760 = vpack.c.b16 %v512, %v508
    %v761 = vpack.c.b16 %v513, %v509
    %v762 = vpack.c.b16 %v514, %v510
    %v763 = vpack.c.b16 %v519, %v515
    %v764 = vpack.c.b16 %v520, %v516
    %v765 = vpack.c.b16 %v521, %v517
    %v766 = vpack.c.b16 %v522, %v518
    %v767 = vpack.c.b16 %v527, %v523
    %v768 = vpack.c.b16 %v528, %v524
    %v769 = vpack.c.b16 %v529, %v525
    %v770 = vpack.c.b16 %v530, %v526
    %v771 = vpack.c.b16 %v535, %v531
    %v772 = vpack.c.b16 %v536, %v532
    %v773 = vpack.c.b16 %v537, %v533
    %v774 = vpack.c.b16 %v538, %v534
    %v775 = vpack.c.b16 %v543, %v539
    %v776 = vpack.c.b16 %v544, %v540
    %v777 = vpack.c.b16 %v545, %v541
    %v778 = vpack.c.b16 %v546, %v542
    %v779 = vpack.c.b16 %v551, %v547
    %v780 = vpack.c.b16 %v552, %v548
    %v781 = vpack.c.b16 %v553, %v549
    %v782 = vpack.c.b16 %v554, %v550
    %v783 = vpack.c.b16 %v559, %v555
    %v784 = vpack.c.b16 %v560, %v556
    %v785 = vpack.c.b16 %v561, %v557
    %v786 = vpack.c.b16 %v562, %v558
    %v787 = vpack.c.b16 %v567, %v563
    %v788 = vpack.c.b16 %v568, %v564
    %v789 = vpack.c.b16 %v569, %v565
    %v790 = vpack.c.b16 %v570, %v566
    %v791 = vpack.c.b16 %v575, %v571
    %v792 = vpack.c.b16 %v576, %v572
    %v793 = vpack.c.b16 %v577, %v573
    %v794 = vpack.c.b16 %v578, %v574
    %v795 = vpack.c.b16 %v583, %v579
    %v796 = vpack.c.b16 %v584, %v580
    %v797 = vpack.c.b16 %v585, %v581
    %v798 = vpack.c.b16 %v586, %v582
    %v799 = vpack.c.b16 %v591, %v587
    %v800 = vpack.c.b16 %v592, %v588
    %v801 = vpack.c.b16 %v593, %v589
    %v802 = vpack.c.b16 %v594, %v590
    %v803 = vpack.c.b16 %v599, %v595
    %v804 = vpack.c.b16 %v600, %v596
    %v805 = vpack.c.b16 %v601, %v597
    %v806 = vpack.c.b16 %v602, %v598
    %v807 = vpack.c.b16 %v607, %v603
    %v808 = vpack.c.b16 %v608, %v604
    %v809 = vpack.c.b16 %v609, %v605
    %v810 = vpack.c.b16 %v610, %v606
    %v811 = vpack.c.b16 %v615, %v611
    %v812 = vpack.c.b16 %v616, %v612
    %v813 = vpack.c.b16 %v617, %v613
    %v814 = vpack.c.b16 %v618, %v614
    %v815 = vpack.c.b16 %v623, %v619
    %v816 = vpack.c.b16 %v624, %v620
    %v817 = vpack.c.b16 %v625, %v621
    %v818 = vpack.c.b16 %v626, %v622
    %v819 = vpack.c.b16 %v631, %v627
    %v820 = vpack.c.b16 %v632, %v628
    %v821 = vpack.c.b16 %v633, %v629
    %v822 = vpack.c.b16 %v634, %v630
    %v823 = vpack.c.b16 %v639, %v635
    %v824 = vpack.c.b16 %v640, %v636
    %v825 = vpack.c.b16 %v641, %v637
    %v826 = vpack.c.b16 %v642, %v638
    %v827 = vpack.c.b16 %v647, %v643
    %v828 = vpack.c.b16 %v648, %v644
    %v829 = vpack.c.b16 %v649, %v645
    %v830 = vpack.c.b16 %v650, %v646
    %v831 = vpack.c.b16 %v655, %v651
    %v832 = vpack.c.b16 %v656, %v652
    %v833 = vpack.c.b16 %v657, %v653
    %v834 = vpack.c.b16 %v658, %v654
    %v835 = vpack.c.b16 %v663, %v659
    %v836 = vpack.c.b16 %v664, %v660
    %v837 = vpack.c.b16 %v665, %v661
    %v838 = vpack.c.b16 %v666, %v662
    %v839 = vpack.c.b16 %v671, %v667
    %v840 = vpack.c.b16 %v672, %v668
    %v841 = vpack.c.b16 %v673, %v669
    %v842 = vpack.c.b16 %v674, %v670
    %v843 = vpack.c.b16 %v679, %v675
    %v844 = vpack.c.b16 %v680, %v676
    %v845 = vpack.c.b16 %v681, %v677
    %v846 = vpack.c.b16 %v682, %v678
    %v847 = vpack.c.b16 %v687, %v683
    %v848 = vpack.c.b16 %v688, %v684
    %v849 = vpack.c.b16 %v689, %v685
    %v850 = vpack.c.b16 %v690, %v686
    %v851 = vpack.c.b16 %v695, %v691
    %v852 = vpack.c.b16 %v696, %v692
    %v853 = vpack.c.b16 %v697, %v693
    %v854 = vpack.c.b16 %v698, %v694
    %v855 = vpack.c.b16 %v703, %v699
    %v856 = vpack.c.b16 %v704, %v700
    %v857 = vpack.c.b16 %v705, %v701
    %v858 = vpack.c.b16 %v706, %v702
    %v859 = vpack.c.b16 %v711, %v707
    %v860 = vpack.c.b16 %v712, %v708
    %v861 = vpack.c.b16 %v713, %v709
    %v862 = vpack.c.b16 %v714, %v710
    %v863 = vpack.c.b16 %v719, %v715
    %v864 = vpack.c.b16 %v720, %v716
    %v865 = vpack.c.b16 %v721, %v717
    %v866 = vpack.c.b16 %v722, %v718
    %v867 = vpack.c.b16 %v727, %v723
    %v868 = vpack.c.b16 %v728, %v724
    %v869 = vpack.c.b16 %v729, %v725
    %v870 = vpack.c.b16 %v730, %v726
    %v871 = vpack.c.b16 %v735, %v731
    %v872 = vpack.c.b16 %v736, %v732
    %v873 = vpack.c.b16 %v737, %v733
    %v874 = vpack.c.b16 %v738, %v734
    %v875 = vpack.c.b16 %v743, %v739
    %v876 = vpack.c.b16 %v744, %v740
    %v877 = vpack.c.b16 %v745, %v741
    %v878 = vpack.c.b16 %v746, %v742
    %v879 = vpack.c.b16 %v751, %v747
    %v880 = vpack.c.b16 %v752, %v748
    %v881 = vpack.c.b16 %v753, %v749
    %v882 = vpack.c.b16 %v754, %v750
    %1011 = vmatpush.bf16.msra.mxu0 %v783
    %1012 = vmatpush.bf16.msra.mxu0 %v779
    %1013 = vmatpush.bf16.msra.mxu0 %v775
    %1014 = vmatpush.bf16.msra.mxu0 %v771
    %1015 = vmatpush.bf16.msra.mxu0 %v767
    %1016 = vmatpush.bf16.msra.mxu0 %v763
    %1017 = vmatpush.bf16.msra.mxu0 %v759
    %1018 = vmatpush.bf16.msra.mxu0 %v755
    %1019 = vmatmul.bf16.gmra.mxu0 %v363
    %v1020 = vpop.f32.mrf.mxu0
    %v1021 = vadd.f32 %v343, %v1020
    %v1022 = vpop.f32.mrf.mxu0
    %v1023 = vadd.f32 %v343, %v1022
    %1024 = vdwg.mxu0
    %1025 = vmatpush.bf16.msra.mxu0 %v815
    %1026 = vmatpush.bf16.msra.mxu0 %v811
    %1027 = vmatpush.bf16.msra.mxu0 %v807
    %1028 = vmatpush.bf16.msra.mxu0 %v803
    %1029 = vmatpush.bf16.msra.mxu0 %v799
    %1030 = vmatpush.bf16.msra.mxu0 %v795
    %1031 = vmatpush.bf16.msra.mxu0 %v791
    %1032 = vmatpush.bf16.msra.mxu0 %v787
    %1033 = vmatmul.bf16.gmra.mxu0 %v364
    %v1034 = vpop.f32.mrf.mxu0
    %v1035 = vadd.f32 %v1021, %v1034
    %v1036 = vpop.f32.mrf.mxu0
    %v1037 = vadd.f32 %v1023, %v1036
    %1038 = vdwg.mxu0
    %1039 = vmatpush.bf16.msra.mxu0 %v847
    %1040 = vmatpush.bf16.msra.mxu0 %v843
    %1041 = vmatpush.bf16.msra.mxu0 %v839
    %1042 = vmatpush.bf16.msra.mxu0 %v835
    %1043 = vmatpush.bf16.msra.mxu0 %v831
    %1044 = vmatpush.bf16.msra.mxu0 %v827
    %1045 = vmatpush.bf16.msra.mxu0 %v823
    %1046 = vmatpush.bf16.msra.mxu0 %v819
    %1047 = vmatmul.bf16.gmra.mxu0 %v365
    %v1048 = vpop.f32.mrf.mxu0
    %v1049 = vadd.f32 %v1035, %v1048
    %v1050 = vpop.f32.mrf.mxu0
    %v1051 = vadd.f32 %v1037, %v1050
    %1052 = vdwg.mxu0
    %1053 = vmatpush.bf16.msra.mxu0 %v879
    %1054 = vmatpush.bf16.msra.mxu0 %v875
    %1055 = vmatpush.bf16.msra.mxu0 %v871
    %1056 = vmatpush.bf16.msra.mxu0 %v867
    %1057 = vmatpush.bf16.msra.mxu0 %v863
    %1058 = vmatpush.bf16.msra.mxu0 %v859
    %1059 = vmatpush.bf16.msra.mxu0 %v855
    %1060 = vmatpush.bf16.msra.mxu0 %v851
    %1061 = vmatmul.bf16.gmra.mxu0 %v366
    %v1062 = vpop.f32.mrf.mxu0
    %v1063 = vadd.f32 %v1049, %v1062
    %v1064 = vpop.f32.mrf.mxu0
    %v1065 = vadd.f32 %v1051, %v1064
    %1066 = vdwg.mxu0
    %1067 = vmatpush.bf16.msra.mxu0 %v784
    %1068 = vmatpush.bf16.msra.mxu0 %v780
    %1069 = vmatpush.bf16.msra.mxu0 %v776
    %1070 = vmatpush.bf16.msra.mxu0 %v772
    %1071 = vmatpush.bf16.msra.mxu0 %v768
    %1072 = vmatpush.bf16.msra.mxu0 %v764
    %1073 = vmatpush.bf16.msra.mxu0 %v760
    %1074 = vmatpush.bf16.msra.mxu0 %v756
    %1075 = vmatmul.bf16.gmra.mxu0 %v363
    %v1076 = vpop.f32.mrf.mxu0
    %v1077 = vadd.f32 %v344, %v1076
    %v1078 = vpop.f32.mrf.mxu0
    %v1079 = vadd.f32 %v344, %v1078
    %1080 = vdwg.mxu0
    %1081 = vmatpush.bf16.msra.mxu0 %v816
    %1082 = vmatpush.bf16.msra.mxu0 %v812
    %1083 = vmatpush.bf16.msra.mxu0 %v808
    %1084 = vmatpush.bf16.msra.mxu0 %v804
    %1085 = vmatpush.bf16.msra.mxu0 %v800
    %1086 = vmatpush.bf16.msra.mxu0 %v796
    %1087 = vmatpush.bf16.msra.mxu0 %v792
    %1088 = vmatpush.bf16.msra.mxu0 %v788
    %1089 = vmatmul.bf16.gmra.mxu0 %v364
    %v1090 = vpop.f32.mrf.mxu0
    %v1091 = vadd.f32 %v1077, %v1090
    %v1092 = vpop.f32.mrf.mxu0
    %v1093 = vadd.f32 %v1079, %v1092
    %1094 = vdwg.mxu0
    %1095 = vmatpush.bf16.msra.mxu0 %v848
    %1096 = vmatpush.bf16.msra.mxu0 %v844
    %1097 = vmatpush.bf16.msra.mxu0 %v840
    %1098 = vmatpush.bf16.msra.mxu0 %v836
    %1099 = vmatpush.bf16.msra.mxu0 %v832
    %1100 = vmatpush.bf16.msra.mxu0 %v828
    %1101 = vmatpush.bf16.msra.mxu0 %v824
    %1102 = vmatpush.bf16.msra.mxu0 %v820
    %1103 = vmatmul.bf16.gmra.mxu0 %v365
    %v1104 = vpop.f32.mrf.mxu0
    %v1105 = vadd.f32 %v1091, %v1104
    %v1106 = vpop.f32.mrf.mxu0
    %v1107 = vadd.f32 %v1093, %v1106
    %1108 = vdwg.mxu0
    %1109 = vmatpush.bf16.msra.mxu0 %v880
    %1110 = vmatpush.bf16.msra.mxu0 %v876
    %1111 = vmatpush.bf16.msra.mxu0 %v872
    %1112 = vmatpush.bf16.msra.mxu0 %v868
    %1113 = vmatpush.bf16.msra.mxu0 %v864
    %1114 = vmatpush.bf16.msra.mxu0 %v860
    %1115 = vmatpush.bf16.msra.mxu0 %v856
    %1116 = vmatpush.bf16.msra.mxu0 %v852
    %1117 = vmatmul.bf16.gmra.mxu0 %v366
    %v1118 = vpop.f32.mrf.mxu0
    %v1119 = vadd.f32 %v1105, %v1118
    %v1120 = vpop.f32.mrf.mxu0
    %v1121 = vadd.f32 %v1107, %v1120
    %1122 = vdwg.mxu0
    %1123 = vmatpush.bf16.msra.mxu0 %v785
    %1124 = vmatpush.bf16.msra.mxu0 %v781
    %1125 = vmatpush.bf16.msra.mxu0 %v777
    %1126 = vmatpush.bf16.msra.mxu0 %v773
    %1127 = vmatpush.bf16.msra.mxu0 %v769
    %1128 = vmatpush.bf16.msra.mxu0 %v765
    %1129 = vmatpush.bf16.msra.mxu0 %v761
    %1130 = vmatpush.bf16.msra.mxu0 %v757
    %1131 = vmatmul.bf16.gmra.mxu0 %v363
    %v1132 = vpop.f32.mrf.mxu0
    %v1133 = vadd.f32 %v345, %v1132
    %v1134 = vpop.f32.mrf.mxu0
    %v1135 = vadd.f32 %v345, %v1134
    %1136 = vdwg.mxu0
    %1137 = vmatpush.bf16.msra.mxu0 %v817
    %1138 = vmatpush.bf16.msra.mxu0 %v813
    %1139 = vmatpush.bf16.msra.mxu0 %v809
    %1140 = vmatpush.bf16.msra.mxu0 %v805
    %1141 = vmatpush.bf16.msra.mxu0 %v801
    %1142 = vmatpush.bf16.msra.mxu0 %v797
    %1143 = vmatpush.bf16.msra.mxu0 %v793
    %1144 = vmatpush.bf16.msra.mxu0 %v789
    %1145 = vmatmul.bf16.gmra.mxu0 %v364
    %v1146 = vpop.f32.mrf.mxu0
    %v1147 = vadd.f32 %v1133, %v1146
    %v1148 = vpop.f32.mrf.mxu0
    %v1149 = vadd.f32 %v1135, %v1148
    %1150 = vdwg.mxu0
    %1151 = vmatpush.bf16.msra.mxu0 %v849
    %1152 = vmatpush.bf16.msra.mxu0 %v845
    %1153 = vmatpush.bf16.msra.mxu0 %v841
    %1154 = vmatpush.bf16.msra.mxu0 %v837
    %1155 = vmatpush.bf16.msra.mxu0 %v833
    %1156 = vmatpush.bf16.msra.mxu0 %v829
    %1157 = vmatpush.bf16.msra.mxu0 %v825
    %1158 = vmatpush.bf16.msra.mxu0 %v821
    %1159 = vmatmul.bf16.gmra.mxu0 %v365
    %v1160 = vpop.f32.mrf.mxu0
    %v1161 = vadd.f32 %v1147, %v1160
    %v1162 = vpop.f32.mrf.mxu0
    %v1163 = vadd.f32 %v1149, %v1162
    %1164 = vdwg.mxu0
    %1165 = vmatpush.bf16.msra.mxu0 %v881
    %1166 = vmatpush.bf16.msra.mxu0 %v877
    %1167 = vmatpush.bf16.msra.mxu0 %v873
    %1168 = vmatpush.bf16.msra.mxu0 %v869
    %1169 = vmatpush.bf16.msra.mxu0 %v865
    %1170 = vmatpush.bf16.msra.mxu0 %v861
    %1171 = vmatpush.bf16.msra.mxu0 %v857
    %1172 = vmatpush.bf16.msra.mxu0 %v853
    %1173 = vmatmul.bf16.gmra.mxu0 %v366
    %v1174 = vpop.f32.mrf.mxu0
    %v1175 = vadd.f32 %v1161, %v1174
    %v1176 = vpop.f32.mrf.mxu0
    %v1177 = vadd.f32 %v1163, %v1176
    %1178 = vdwg.mxu0
    %1179 = vmatpush.bf16.msra.mxu0 %v786
    %1180 = vmatpush.bf16.msra.mxu0 %v782
    %1181 = vmatpush.bf16.msra.mxu0 %v778
    %1182 = vmatpush.bf16.msra.mxu0 %v774
    %1183 = vmatpush.bf16.msra.mxu0 %v770
    %1184 = vmatpush.bf16.msra.mxu0 %v766
    %1185 = vmatpush.bf16.msra.mxu0 %v762
    %1186 = vmatpush.bf16.msra.mxu0 %v758
    %1187 = vmatmul.bf16.gmra.mxu0 %v363
    %v1188 = vpop.f32.mrf.mxu0
    %v1189 = vadd.f32 %v346, %v1188
    %v1190 = vpop.f32.mrf.mxu0
    %v1191 = vadd.f32 %v346, %v1190
    %1192 = vdwg.mxu0
    %1193 = vmatpush.bf16.msra.mxu0 %v818
    %1194 = vmatpush.bf16.msra.mxu0 %v814
    %1195 = vmatpush.bf16.msra.mxu0 %v810
    %1196 = vmatpush.bf16.msra.mxu0 %v806
    %1197 = vmatpush.bf16.msra.mxu0 %v802
    %1198 = vmatpush.bf16.msra.mxu0 %v798
    %1199 = vmatpush.bf16.msra.mxu0 %v794
    %1200 = vmatpush.bf16.msra.mxu0 %v790
    %1201 = vmatmul.bf16.gmra.mxu0 %v364
    %v1202 = vpop.f32.mrf.mxu0
    %v1203 = vadd.f32 %v1189, %v1202
    %v1204 = vpop.f32.mrf.mxu0
    %v1205 = vadd.f32 %v1191, %v1204
    %1206 = vdwg.mxu0
    %1207 = vmatpush.bf16.msra.mxu0 %v850
    %1208 = vmatpush.bf16.msra.mxu0 %v846
    %1209 = vmatpush.bf16.msra.mxu0 %v842
    %1210 = vmatpush.bf16.msra.mxu0 %v838
    %1211 = vmatpush.bf16.msra.mxu0 %v834
    %1212 = vmatpush.bf16.msra.mxu0 %v830
    %1213 = vmatpush.bf16.msra.mxu0 %v826
    %1214 = vmatpush.bf16.msra.mxu0 %v822
    %1215 = vmatmul.bf16.gmra.mxu0 %v365
    %v1216 = vpop.f32.mrf.mxu0
    %v1217 = vadd.f32 %v1203, %v1216
    %v1218 = vpop.f32.mrf.mxu0
    %v1219 = vadd.f32 %v1205, %v1218
    %1220 = vdwg.mxu0
    %1221 = vmatpush.bf16.msra.mxu0 %v882
    %1222 = vmatpush.bf16.msra.mxu0 %v878
    %1223 = vmatpush.bf16.msra.mxu0 %v874
    %1224 = vmatpush.bf16.msra.mxu0 %v870
    %1225 = vmatpush.bf16.msra.mxu0 %v866
    %1226 = vmatpush.bf16.msra.mxu0 %v862
    %1227 = vmatpush.bf16.msra.mxu0 %v858
    %1228 = vmatpush.bf16.msra.mxu0 %v854
    %1229 = vmatmul.bf16.gmra.mxu0 %v366
    %v1230 = vpop.f32.mrf.mxu0
    %v1231 = vadd.f32 %v1217, %v1230
    %v1232 = vpop.f32.mrf.mxu0
    %v1233 = vadd.f32 %v1219, %v1232
    %1234 = vdwg.mxu0
    %v1235 = vmax.f32 %v1063, 0.0
    %v1236 = vmax.f32 %v1119, 0.0
    %v1237 = vmax.f32 %v1175, 0.0
    %v1238 = vmax.f32 %v1231, 0.0
    %v1239 = vmax.f32 %v1065, 0.0
    %v1240 = vmax.f32 %v1121, 0.0
    %v1241 = vmax.f32 %v1177, 0.0
    %v1242 = vmax.f32 %v1233, 0.0
    %v1243 = vpack.c.bf16 %v1236, %v1235
    %v1244 = vpack.c.bf16 %v1238, %v1237
    %v1245 = vpack.c.bf16 %v1240, %v1239
    %v1246 = vpack.c.bf16 %v1242, %v1241
    %1247 = vst [vmem:[#allocation2] sm:$0xff] %v1243
    %1248 = vst [vmem:[#allocation2 + $0x8] sm:$0xff] %v1244
    %1249 = vst [vmem:[#allocation2 + $0x10] sm:$0xff] %v1245
    %1250 = vst [vmem:[#allocation2 + $0x18] sm:$0xff] %v1246
    %v1251 = vld [vmem:[#allocation2] sm:$0xff]
    %v1252 = vld [vmem:[#allocation2 + $0x8] sm:$0xff]
    %v1253 = vld [vmem:[#allocation2 + $0x10] sm:$0xff]
    %v1254 = vld [vmem:[#allocation2 + $0x18] sm:$0xff]
    %v1255 = vld [vmem:[#allocation7] sm:$0xff]
    %v1256 = vld [vmem:[#allocation7 + $0x8] sm:$0xff]
    %v1257 = vld [vmem:[#allocation7 + $0x10] sm:$0xff]
    %v1258 = vld [vmem:[#allocation7 + $0x18] sm:$0xff]
    %v1259 = vld [vmem:[#allocation7 + $0x20] sm:$0xff]
    %v1260 = vld [vmem:[#allocation7 + $0x28] sm:$0xff]
    %v1261 = vld [vmem:[#allocation7 + $0x30] sm:$0xff]
    %v1262 = vld [vmem:[#allocation7 + $0x38] sm:$0xff]
    %v1263 = vld [vmem:[#allocation7 + $0x40] sm:$0xff]
    %v1264 = vld [vmem:[#allocation7 + $0x48] sm:$0xff]
    %v1265 = vld [vmem:[#allocation7 + $0x50] sm:$0xff]
    %v1266 = vld [vmem:[#allocation7 + $0x58] sm:$0xff]
    %v1267 = vld [vmem:[#allocation7 + $0x60] sm:$0xff]
    %v1268 = vld [vmem:[#allocation7 + $0x68] sm:$0xff]
    %v1269 = vld [vmem:[#allocation7 + $0x70] sm:$0xff]
    %v1270 = vld [vmem:[#allocation7 + $0x78] sm:$0xff]
    %v1271 = vld [vmem:[#allocation7 + $0x80] sm:$0xff]
    %v1272 = vld [vmem:[#allocation7 + $0x88] sm:$0xff]
    %v1273 = vld [vmem:[#allocation7 + $0x90] sm:$0xff]
    %v1274 = vld [vmem:[#allocation7 + $0x98] sm:$0xff]
    %v1275 = vld [vmem:[#allocation7 + $0xa0] sm:$0xff]
    %v1276 = vld [vmem:[#allocation7 + $0xa8] sm:$0xff]
    %v1277 = vld [vmem:[#allocation7 + $0xb0] sm:$0xff]
    %v1278 = vld [vmem:[#allocation7 + $0xb8] sm:$0xff]
    %v1279 = vld [vmem:[#allocation7 + $0xc0] sm:$0xff]
    %v1280 = vld [vmem:[#allocation7 + $0xc8] sm:$0xff]
    %v1281 = vld [vmem:[#allocation7 + $0xd0] sm:$0xff]
    %v1282 = vld [vmem:[#allocation7 + $0xd8] sm:$0xff]
    %v1283 = vld [vmem:[#allocation7 + $0xe0] sm:$0xff]
    %v1284 = vld [vmem:[#allocation7 + $0xe8] sm:$0xff]
    %v1285 = vld [vmem:[#allocation7 + $0xf0] sm:$0xff]
    %v1286 = vld [vmem:[#allocation7 + $0xf8] sm:$0xff]
    %v1287 = vld [vmem:[#allocation7 + $0x100] sm:$0xff]
    %v1288 = vld [vmem:[#allocation7 + $0x108] sm:$0xff]
    %v1289 = vld [vmem:[#allocation7 + $0x110] sm:$0xff]
    %v1290 = vld [vmem:[#allocation7 + $0x118] sm:$0xff]
    %v1291 = vld [vmem:[#allocation7 + $0x120] sm:$0xff]
    %v1292 = vld [vmem:[#allocation7 + $0x128] sm:$0xff]
    %v1293 = vld [vmem:[#allocation7 + $0x130] sm:$0xff]
    %v1294 = vld [vmem:[#allocation7 + $0x138] sm:$0xff]
    %v1295 = vld [vmem:[#allocation7 + $0x140] sm:$0xff]
    %v1296 = vld [vmem:[#allocation7 + $0x148] sm:$0xff]
    %v1297 = vld [vmem:[#allocation7 + $0x150] sm:$0xff]
    %v1298 = vld [vmem:[#allocation7 + $0x158] sm:$0xff]
    %v1299 = vld [vmem:[#allocation7 + $0x160] sm:$0xff]
    %v1300 = vld [vmem:[#allocation7 + $0x168] sm:$0xff]
    %v1301 = vld [vmem:[#allocation7 + $0x170] sm:$0xff]
    %v1302 = vld [vmem:[#allocation7 + $0x178] sm:$0xff]
    %v1303 = vld [vmem:[#allocation7 + $0x180] sm:$0xff]
    %v1304 = vld [vmem:[#allocation7 + $0x188] sm:$0xff]
    %v1305 = vld [vmem:[#allocation7 + $0x190] sm:$0xff]
    %v1306 = vld [vmem:[#allocation7 + $0x198] sm:$0xff]
    %v1307 = vld [vmem:[#allocation7 + $0x1a0] sm:$0xff]
    %v1308 = vld [vmem:[#allocation7 + $0x1a8] sm:$0xff]
    %v1309 = vld [vmem:[#allocation7 + $0x1b0] sm:$0xff]
    %v1310 = vld [vmem:[#allocation7 + $0x1b8] sm:$0xff]
    %v1311 = vld [vmem:[#allocation7 + $0x1c0] sm:$0xff]
    %v1312 = vld [vmem:[#allocation7 + $0x1c8] sm:$0xff]
    %v1313 = vld [vmem:[#allocation7 + $0x1d0] sm:$0xff]
    %v1314 = vld [vmem:[#allocation7 + $0x1d8] sm:$0xff]
    %v1315 = vld [vmem:[#allocation7 + $0x1e0] sm:$0xff]
    %v1316 = vld [vmem:[#allocation7 + $0x1e8] sm:$0xff]
    %v1317 = vld [vmem:[#allocation7 + $0x1f0] sm:$0xff]
    %v1318 = vld [vmem:[#allocation7 + $0x1f8] sm:$0xff]
    %v1319 = vld [vmem:[#allocation7 + $0x200] sm:$0xff]
    %v1320 = vld [vmem:[#allocation7 + $0x208] sm:$0xff]
    %v1321 = vld [vmem:[#allocation7 + $0x210] sm:$0xff]
    %v1322 = vld [vmem:[#allocation7 + $0x218] sm:$0xff]
    %v1323 = vld [vmem:[#allocation7 + $0x220] sm:$0xff]
    %v1324 = vld [vmem:[#allocation7 + $0x228] sm:$0xff]
    %v1325 = vld [vmem:[#allocation7 + $0x230] sm:$0xff]
    %v1326 = vld [vmem:[#allocation7 + $0x238] sm:$0xff]
    %v1327 = vld [vmem:[#allocation7 + $0x240] sm:$0xff]
    %v1328 = vld [vmem:[#allocation7 + $0x248] sm:$0xff]
    %v1329 = vld [vmem:[#allocation7 + $0x250] sm:$0xff]
    %v1330 = vld [vmem:[#allocation7 + $0x258] sm:$0xff]
    %v1331 = vld [vmem:[#allocation7 + $0x260] sm:$0xff]
    %v1332 = vld [vmem:[#allocation7 + $0x268] sm:$0xff]
    %v1333 = vld [vmem:[#allocation7 + $0x270] sm:$0xff]
    %v1334 = vld [vmem:[#allocation7 + $0x278] sm:$0xff]
    %v1335 = vld [vmem:[#allocation7 + $0x280] sm:$0xff]
    %v1336 = vld [vmem:[#allocation7 + $0x288] sm:$0xff]
    %v1337 = vld [vmem:[#allocation7 + $0x290] sm:$0xff]
    %v1338 = vld [vmem:[#allocation7 + $0x298] sm:$0xff]
    %v1339 = vld [vmem:[#allocation7 + $0x2a0] sm:$0xff]
    %v1340 = vld [vmem:[#allocation7 + $0x2a8] sm:$0xff]
    %v1341 = vld [vmem:[#allocation7 + $0x2b0] sm:$0xff]
    %v1342 = vld [vmem:[#allocation7 + $0x2b8] sm:$0xff]
    %v1343 = vld [vmem:[#allocation7 + $0x2c0] sm:$0xff]
    %v1344 = vld [vmem:[#allocation7 + $0x2c8] sm:$0xff]
    %v1345 = vld [vmem:[#allocation7 + $0x2d0] sm:$0xff]
    %v1346 = vld [vmem:[#allocation7 + $0x2d8] sm:$0xff]
    %v1347 = vld [vmem:[#allocation7 + $0x2e0] sm:$0xff]
    %v1348 = vld [vmem:[#allocation7 + $0x2e8] sm:$0xff]
    %v1349 = vld [vmem:[#allocation7 + $0x2f0] sm:$0xff]
    %v1350 = vld [vmem:[#allocation7 + $0x2f8] sm:$0xff]
    %v1351 = vld [vmem:[#allocation7 + $0x300] sm:$0xff]
    %v1352 = vld [vmem:[#allocation7 + $0x308] sm:$0xff]
    %v1353 = vld [vmem:[#allocation7 + $0x310] sm:$0xff]
    %v1354 = vld [vmem:[#allocation7 + $0x318] sm:$0xff]
    %v1355 = vld [vmem:[#allocation7 + $0x320] sm:$0xff]
    %v1356 = vld [vmem:[#allocation7 + $0x328] sm:$0xff]
    %v1357 = vld [vmem:[#allocation7 + $0x330] sm:$0xff]
    %v1358 = vld [vmem:[#allocation7 + $0x338] sm:$0xff]
    %v1359 = vld [vmem:[#allocation7 + $0x340] sm:$0xff]
    %v1360 = vld [vmem:[#allocation7 + $0x348] sm:$0xff]
    %v1361 = vld [vmem:[#allocation7 + $0x350] sm:$0xff]
    %v1362 = vld [vmem:[#allocation7 + $0x358] sm:$0xff]
    %v1363 = vld [vmem:[#allocation7 + $0x360] sm:$0xff]
    %v1364 = vld [vmem:[#allocation7 + $0x368] sm:$0xff]
    %v1365 = vld [vmem:[#allocation7 + $0x370] sm:$0xff]
    %v1366 = vld [vmem:[#allocation7 + $0x378] sm:$0xff]
    %v1367 = vld [vmem:[#allocation7 + $0x380] sm:$0xff]
    %v1368 = vld [vmem:[#allocation7 + $0x388] sm:$0xff]
    %v1369 = vld [vmem:[#allocation7 + $0x390] sm:$0xff]
    %v1370 = vld [vmem:[#allocation7 + $0x398] sm:$0xff]
    %v1371 = vld [vmem:[#allocation7 + $0x3a0] sm:$0xff]
    %v1372 = vld [vmem:[#allocation7 + $0x3a8] sm:$0xff]
    %v1373 = vld [vmem:[#allocation7 + $0x3b0] sm:$0xff]
    %v1374 = vld [vmem:[#allocation7 + $0x3b8] sm:$0xff]
    %v1375 = vld [vmem:[#allocation7 + $0x3c0] sm:$0xff]
    %v1376 = vld [vmem:[#allocation7 + $0x3c8] sm:$0xff]
    %v1377 = vld [vmem:[#allocation7 + $0x3d0] sm:$0xff]
    %v1378 = vld [vmem:[#allocation7 + $0x3d8] sm:$0xff]
    %v1379 = vld [vmem:[#allocation7 + $0x3e0] sm:$0xff]
    %v1380 = vld [vmem:[#allocation7 + $0x3e8] sm:$0xff]
    %v1381 = vld [vmem:[#allocation7 + $0x3f0] sm:$0xff]
    %v1382 = vld [vmem:[#allocation7 + $0x3f8] sm:$0xff]
    %v1383 = vld [vmem:[%s6] sm:$0xf]
    %v1385 = vperm.slane %v1383, 0
    %v1386 = vperm.slane %v1383, 1
    %v1387 = vperm.slane %v1383, 2
    %v1388 = vperm.slane %v1383, 3
    %v1397 = vunpack.c.l.b16 %v1251
    %v1398 = vunpack.c.h.b16 %v1251
    %v1399 = vunpack.c.l.b16 %v1252
    %v1400 = vunpack.c.h.b16 %v1252
    %v1401 = vunpack.c.l.b16 %v1253
    %v1402 = vunpack.c.h.b16 %v1253
    %v1403 = vunpack.c.l.b16 %v1254
    %v1404 = vunpack.c.h.b16 %v1254
    %v1405 = vpack.c.b16 %v1401, %v1397
    %v1406 = vpack.c.b16 %v1402, %v1398
    %v1407 = vpack.c.b16 %v1403, %v1399
    %v1408 = vpack.c.b16 %v1404, %v1400
    %v1541 = vunpack.c.l.b16 %v1255
    %v1542 = vunpack.c.h.b16 %v1255
    %v1543 = vunpack.c.l.b16 %v1256
    %v1544 = vunpack.c.h.b16 %v1256
    %v1545 = vunpack.c.l.b16 %v1257
    %v1546 = vunpack.c.h.b16 %v1257
    %v1547 = vunpack.c.l.b16 %v1258
    %v1548 = vunpack.c.h.b16 %v1258
    %v1549 = vunpack.c.l.b16 %v1259
    %v1550 = vunpack.c.h.b16 %v1259
    %v1551 = vunpack.c.l.b16 %v1260
    %v1552 = vunpack.c.h.b16 %v1260
    %v1553 = vunpack.c.l.b16 %v1261
    %v1554 = vunpack.c.h.b16 %v1261
    %v1555 = vunpack.c.l.b16 %v1262
    %v1556 = vunpack.c.h.b16 %v1262
    %v1557 = vunpack.c.l.b16 %v1263
    %v1558 = vunpack.c.h.b16 %v1263
    %v1559 = vunpack.c.l.b16 %v1264
    %v1560 = vunpack.c.h.b16 %v1264
    %v1561 = vunpack.c.l.b16 %v1265
    %v1562 = vunpack.c.h.b16 %v1265
    %v1563 = vunpack.c.l.b16 %v1266
    %v1564 = vunpack.c.h.b16 %v1266
    %v1565 = vunpack.c.l.b16 %v1267
    %v1566 = vunpack.c.h.b16 %v1267
    %v1567 = vunpack.c.l.b16 %v1268
    %v1568 = vunpack.c.h.b16 %v1268
    %v1569 = vunpack.c.l.b16 %v1269
    %v1570 = vunpack.c.h.b16 %v1269
    %v1571 = vunpack.c.l.b16 %v1270
    %v1572 = vunpack.c.h.b16 %v1270
    %v1573 = vunpack.c.l.b16 %v1271
    %v1574 = vunpack.c.h.b16 %v1271
    %v1575 = vunpack.c.l.b16 %v1272
    %v1576 = vunpack.c.h.b16 %v1272
    %v1577 = vunpack.c.l.b16 %v1273
    %v1578 = vunpack.c.h.b16 %v1273
    %v1579 = vunpack.c.l.b16 %v1274
    %v1580 = vunpack.c.h.b16 %v1274
    %v1581 = vunpack.c.l.b16 %v1275
    %v1582 = vunpack.c.h.b16 %v1275
    %v1583 = vunpack.c.l.b16 %v1276
    %v1584 = vunpack.c.h.b16 %v1276
    %v1585 = vunpack.c.l.b16 %v1277
    %v1586 = vunpack.c.h.b16 %v1277
    %v1587 = vunpack.c.l.b16 %v1278
    %v1588 = vunpack.c.h.b16 %v1278
    %v1589 = vunpack.c.l.b16 %v1279
    %v1590 = vunpack.c.h.b16 %v1279
    %v1591 = vunpack.c.l.b16 %v1280
    %v1592 = vunpack.c.h.b16 %v1280
    %v1593 = vunpack.c.l.b16 %v1281
    %v1594 = vunpack.c.h.b16 %v1281
    %v1595 = vunpack.c.l.b16 %v1282
    %v1596 = vunpack.c.h.b16 %v1282
    %v1597 = vunpack.c.l.b16 %v1283
    %v1598 = vunpack.c.h.b16 %v1283
    %v1599 = vunpack.c.l.b16 %v1284
    %v1600 = vunpack.c.h.b16 %v1284
    %v1601 = vunpack.c.l.b16 %v1285
    %v1602 = vunpack.c.h.b16 %v1285
    %v1603 = vunpack.c.l.b16 %v1286
    %v1604 = vunpack.c.h.b16 %v1286
    %v1605 = vunpack.c.l.b16 %v1287
    %v1606 = vunpack.c.h.b16 %v1287
    %v1607 = vunpack.c.l.b16 %v1288
    %v1608 = vunpack.c.h.b16 %v1288
    %v1609 = vunpack.c.l.b16 %v1289
    %v1610 = vunpack.c.h.b16 %v1289
    %v1611 = vunpack.c.l.b16 %v1290
    %v1612 = vunpack.c.h.b16 %v1290
    %v1613 = vunpack.c.l.b16 %v1291
    %v1614 = vunpack.c.h.b16 %v1291
    %v1615 = vunpack.c.l.b16 %v1292
    %v1616 = vunpack.c.h.b16 %v1292
    %v1617 = vunpack.c.l.b16 %v1293
    %v1618 = vunpack.c.h.b16 %v1293
    %v1619 = vunpack.c.l.b16 %v1294
    %v1620 = vunpack.c.h.b16 %v1294
    %v1621 = vunpack.c.l.b16 %v1295
    %v1622 = vunpack.c.h.b16 %v1295
    %v1623 = vunpack.c.l.b16 %v1296
    %v1624 = vunpack.c.h.b16 %v1296
    %v1625 = vunpack.c.l.b16 %v1297
    %v1626 = vunpack.c.h.b16 %v1297
    %v1627 = vunpack.c.l.b16 %v1298
    %v1628 = vunpack.c.h.b16 %v1298
    %v1629 = vunpack.c.l.b16 %v1299
    %v1630 = vunpack.c.h.b16 %v1299
    %v1631 = vunpack.c.l.b16 %v1300
    %v1632 = vunpack.c.h.b16 %v1300
    %v1633 = vunpack.c.l.b16 %v1301
    %v1634 = vunpack.c.h.b16 %v1301
    %v1635 = vunpack.c.l.b16 %v1302
    %v1636 = vunpack.c.h.b16 %v1302
    %v1637 = vunpack.c.l.b16 %v1303
    %v1638 = vunpack.c.h.b16 %v1303
    %v1639 = vunpack.c.l.b16 %v1304
    %v1640 = vunpack.c.h.b16 %v1304
    %v1641 = vunpack.c.l.b16 %v1305
    %v1642 = vunpack.c.h.b16 %v1305
    %v1643 = vunpack.c.l.b16 %v1306
    %v1644 = vunpack.c.h.b16 %v1306
    %v1645 = vunpack.c.l.b16 %v1307
    %v1646 = vunpack.c.h.b16 %v1307
    %v1647 = vunpack.c.l.b16 %v1308
    %v1648 = vunpack.c.h.b16 %v1308
    %v1649 = vunpack.c.l.b16 %v1309
    %v1650 = vunpack.c.h.b16 %v1309
    %v1651 = vunpack.c.l.b16 %v1310
    %v1652 = vunpack.c.h.b16 %v1310
    %v1653 = vunpack.c.l.b16 %v1311
    %v1654 = vunpack.c.h.b16 %v1311
    %v1655 = vunpack.c.l.b16 %v1312
    %v1656 = vunpack.c.h.b16 %v1312
    %v1657 = vunpack.c.l.b16 %v1313
    %v1658 = vunpack.c.h.b16 %v1313
    %v1659 = vunpack.c.l.b16 %v1314
    %v1660 = vunpack.c.h.b16 %v1314
    %v1661 = vunpack.c.l.b16 %v1315
    %v1662 = vunpack.c.h.b16 %v1315
    %v1663 = vunpack.c.l.b16 %v1316
    %v1664 = vunpack.c.h.b16 %v1316
    %v1665 = vunpack.c.l.b16 %v1317
    %v1666 = vunpack.c.h.b16 %v1317
    %v1667 = vunpack.c.l.b16 %v1318
    %v1668 = vunpack.c.h.b16 %v1318
    %v1669 = vunpack.c.l.b16 %v1319
    %v1670 = vunpack.c.h.b16 %v1319
    %v1671 = vunpack.c.l.b16 %v1320
    %v1672 = vunpack.c.h.b16 %v1320
    %v1673 = vunpack.c.l.b16 %v1321
    %v1674 = vunpack.c.h.b16 %v1321
    %v1675 = vunpack.c.l.b16 %v1322
    %v1676 = vunpack.c.h.b16 %v1322
    %v1677 = vunpack.c.l.b16 %v1323
    %v1678 = vunpack.c.h.b16 %v1323
    %v1679 = vunpack.c.l.b16 %v1324
    %v1680 = vunpack.c.h.b16 %v1324
    %v1681 = vunpack.c.l.b16 %v1325
    %v1682 = vunpack.c.h.b16 %v1325
    %v1683 = vunpack.c.l.b16 %v1326
    %v1684 = vunpack.c.h.b16 %v1326
    %v1685 = vunpack.c.l.b16 %v1327
    %v1686 = vunpack.c.h.b16 %v1327
    %v1687 = vunpack.c.l.b16 %v1328
    %v1688 = vunpack.c.h.b16 %v1328
    %v1689 = vunpack.c.l.b16 %v1329
    %v1690 = vunpack.c.h.b16 %v1329
    %v1691 = vunpack.c.l.b16 %v1330
    %v1692 = vunpack.c.h.b16 %v1330
    %v1693 = vunpack.c.l.b16 %v1331
    %v1694 = vunpack.c.h.b16 %v1331
    %v1695 = vunpack.c.l.b16 %v1332
    %v1696 = vunpack.c.h.b16 %v1332
    %v1697 = vunpack.c.l.b16 %v1333
    %v1698 = vunpack.c.h.b16 %v1333
    %v1699 = vunpack.c.l.b16 %v1334
    %v1700 = vunpack.c.h.b16 %v1334
    %v1701 = vunpack.c.l.b16 %v1335
    %v1702 = vunpack.c.h.b16 %v1335
    %v1703 = vunpack.c.l.b16 %v1336
    %v1704 = vunpack.c.h.b16 %v1336
    %v1705 = vunpack.c.l.b16 %v1337
    %v1706 = vunpack.c.h.b16 %v1337
    %v1707 = vunpack.c.l.b16 %v1338
    %v1708 = vunpack.c.h.b16 %v1338
    %v1709 = vunpack.c.l.b16 %v1339
    %v1710 = vunpack.c.h.b16 %v1339
    %v1711 = vunpack.c.l.b16 %v1340
    %v1712 = vunpack.c.h.b16 %v1340
    %v1713 = vunpack.c.l.b16 %v1341
    %v1714 = vunpack.c.h.b16 %v1341
    %v1715 = vunpack.c.l.b16 %v1342
    %v1716 = vunpack.c.h.b16 %v1342
    %v1717 = vunpack.c.l.b16 %v1343
    %v1718 = vunpack.c.h.b16 %v1343
    %v1719 = vunpack.c.l.b16 %v1344
    %v1720 = vunpack.c.h.b16 %v1344
    %v1721 = vunpack.c.l.b16 %v1345
    %v1722 = vunpack.c.h.b16 %v1345
    %v1723 = vunpack.c.l.b16 %v1346
    %v1724 = vunpack.c.h.b16 %v1346
    %v1725 = vunpack.c.l.b16 %v1347
    %v1726 = vunpack.c.h.b16 %v1347
    %v1727 = vunpack.c.l.b16 %v1348
    %v1728 = vunpack.c.h.b16 %v1348
    %v1729 = vunpack.c.l.b16 %v1349
    %v1730 = vunpack.c.h.b16 %v1349
    %v1731 = vunpack.c.l.b16 %v1350
    %v1732 = vunpack.c.h.b16 %v1350
    %v1733 = vunpack.c.l.b16 %v1351
    %v1734 = vunpack.c.h.b16 %v1351
    %v1735 = vunpack.c.l.b16 %v1352
    %v1736 = vunpack.c.h.b16 %v1352
    %v1737 = vunpack.c.l.b16 %v1353
    %v1738 = vunpack.c.h.b16 %v1353
    %v1739 = vunpack.c.l.b16 %v1354
    %v1740 = vunpack.c.h.b16 %v1354
    %v1741 = vunpack.c.l.b16 %v1355
    %v1742 = vunpack.c.h.b16 %v1355
    %v1743 = vunpack.c.l.b16 %v1356
    %v1744 = vunpack.c.h.b16 %v1356
    %v1745 = vunpack.c.l.b16 %v1357
    %v1746 = vunpack.c.h.b16 %v1357
    %v1747 = vunpack.c.l.b16 %v1358
    %v1748 = vunpack.c.h.b16 %v1358
    %v1749 = vunpack.c.l.b16 %v1359
    %v1750 = vunpack.c.h.b16 %v1359
    %v1751 = vunpack.c.l.b16 %v1360
    %v1752 = vunpack.c.h.b16 %v1360
    %v1753 = vunpack.c.l.b16 %v1361
    %v1754 = vunpack.c.h.b16 %v1361
    %v1755 = vunpack.c.l.b16 %v1362
    %v1756 = vunpack.c.h.b16 %v1362
    %v1757 = vunpack.c.l.b16 %v1363
    %v1758 = vunpack.c.h.b16 %v1363
    %v1759 = vunpack.c.l.b16 %v1364
    %v1760 = vunpack.c.h.b16 %v1364
    %v1761 = vunpack.c.l.b16 %v1365
    %v1762 = vunpack.c.h.b16 %v1365
    %v1763 = vunpack.c.l.b16 %v1366
    %v1764 = vunpack.c.h.b16 %v1366
    %v1765 = vunpack.c.l.b16 %v1367
    %v1766 = vunpack.c.h.b16 %v1367
    %v1767 = vunpack.c.l.b16 %v1368
    %v1768 = vunpack.c.h.b16 %v1368
    %v1769 = vunpack.c.l.b16 %v1369
    %v1770 = vunpack.c.h.b16 %v1369
    %v1771 = vunpack.c.l.b16 %v1370
    %v1772 = vunpack.c.h.b16 %v1370
    %v1773 = vunpack.c.l.b16 %v1371
    %v1774 = vunpack.c.h.b16 %v1371
    %v1775 = vunpack.c.l.b16 %v1372
    %v1776 = vunpack.c.h.b16 %v1372
    %v1777 = vunpack.c.l.b16 %v1373
    %v1778 = vunpack.c.h.b16 %v1373
    %v1779 = vunpack.c.l.b16 %v1374
    %v1780 = vunpack.c.h.b16 %v1374
    %v1781 = vunpack.c.l.b16 %v1375
    %v1782 = vunpack.c.h.b16 %v1375
    %v1783 = vunpack.c.l.b16 %v1376
    %v1784 = vunpack.c.h.b16 %v1376
    %v1785 = vunpack.c.l.b16 %v1377
    %v1786 = vunpack.c.h.b16 %v1377
    %v1787 = vunpack.c.l.b16 %v1378
    %v1788 = vunpack.c.h.b16 %v1378
    %v1789 = vunpack.c.l.b16 %v1379
    %v1790 = vunpack.c.h.b16 %v1379
    %v1791 = vunpack.c.l.b16 %v1380
    %v1792 = vunpack.c.h.b16 %v1380
    %v1793 = vunpack.c.l.b16 %v1381
    %v1794 = vunpack.c.h.b16 %v1381
    %v1795 = vunpack.c.l.b16 %v1382
    %v1796 = vunpack.c.h.b16 %v1382
    %v1797 = vpack.c.b16 %v1545, %v1541
    %v1798 = vpack.c.b16 %v1546, %v1542
    %v1799 = vpack.c.b16 %v1547, %v1543
    %v1800 = vpack.c.b16 %v1548, %v1544
    %v1801 = vpack.c.b16 %v1553, %v1549
    %v1802 = vpack.c.b16 %v1554, %v1550
    %v1803 = vpack.c.b16 %v1555, %v1551
    %v1804 = vpack.c.b16 %v1556, %v1552
    %v1805 = vpack.c.b16 %v1561, %v1557
    %v1806 = vpack.c.b16 %v1562, %v1558
    %v1807 = vpack.c.b16 %v1563, %v1559
    %v1808 = vpack.c.b16 %v1564, %v1560
    %v1809 = vpack.c.b16 %v1569, %v1565
    %v1810 = vpack.c.b16 %v1570, %v1566
    %v1811 = vpack.c.b16 %v1571, %v1567
    %v1812 = vpack.c.b16 %v1572, %v1568
    %v1813 = vpack.c.b16 %v1577, %v1573
    %v1814 = vpack.c.b16 %v1578, %v1574
    %v1815 = vpack.c.b16 %v1579, %v1575
    %v1816 = vpack.c.b16 %v1580, %v1576
    %v1817 = vpack.c.b16 %v1585, %v1581
    %v1818 = vpack.c.b16 %v1586, %v1582
    %v1819 = vpack.c.b16 %v1587, %v1583
    %v1820 = vpack.c.b16 %v1588, %v1584
    %v1821 = vpack.c.b16 %v1593, %v1589
    %v1822 = vpack.c.b16 %v1594, %v1590
    %v1823 = vpack.c.b16 %v1595, %v1591
    %v1824 = vpack.c.b16 %v1596, %v1592
    %v1825 = vpack.c.b16 %v1601, %v1597
    %v1826 = vpack.c.b16 %v1602, %v1598
    %v1827 = vpack.c.b16 %v1603, %v1599
    %v1828 = vpack.c.b16 %v1604, %v1600
    %v1829 = vpack.c.b16 %v1609, %v1605
    %v1830 = vpack.c.b16 %v1610, %v1606
    %v1831 = vpack.c.b16 %v1611, %v1607
    %v1832 = vpack.c.b16 %v1612, %v1608
    %v1833 = vpack.c.b16 %v1617, %v1613
    %v1834 = vpack.c.b16 %v1618, %v1614
    %v1835 = vpack.c.b16 %v1619, %v1615
    %v1836 = vpack.c.b16 %v1620, %v1616
    %v1837 = vpack.c.b16 %v1625, %v1621
    %v1838 = vpack.c.b16 %v1626, %v1622
    %v1839 = vpack.c.b16 %v1627, %v1623
    %v1840 = vpack.c.b16 %v1628, %v1624
    %v1841 = vpack.c.b16 %v1633, %v1629
    %v1842 = vpack.c.b16 %v1634, %v1630
    %v1843 = vpack.c.b16 %v1635, %v1631
    %v1844 = vpack.c.b16 %v1636, %v1632
    %v1845 = vpack.c.b16 %v1641, %v1637
    %v1846 = vpack.c.b16 %v1642, %v1638
    %v1847 = vpack.c.b16 %v1643, %v1639
    %v1848 = vpack.c.b16 %v1644, %v1640
    %v1849 = vpack.c.b16 %v1649, %v1645
    %v1850 = vpack.c.b16 %v1650, %v1646
    %v1851 = vpack.c.b16 %v1651, %v1647
    %v1852 = vpack.c.b16 %v1652, %v1648
    %v1853 = vpack.c.b16 %v1657, %v1653
    %v1854 = vpack.c.b16 %v1658, %v1654
    %v1855 = vpack.c.b16 %v1659, %v1655
    %v1856 = vpack.c.b16 %v1660, %v1656
    %v1857 = vpack.c.b16 %v1665, %v1661
    %v1858 = vpack.c.b16 %v1666, %v1662
    %v1859 = vpack.c.b16 %v1667, %v1663
    %v1860 = vpack.c.b16 %v1668, %v1664
    %v1861 = vpack.c.b16 %v1673, %v1669
    %v1862 = vpack.c.b16 %v1674, %v1670
    %v1863 = vpack.c.b16 %v1675, %v1671
    %v1864 = vpack.c.b16 %v1676, %v1672
    %v1865 = vpack.c.b16 %v1681, %v1677
    %v1866 = vpack.c.b16 %v1682, %v1678
    %v1867 = vpack.c.b16 %v1683, %v1679
    %v1868 = vpack.c.b16 %v1684, %v1680
    %v1869 = vpack.c.b16 %v1689, %v1685
    %v1870 = vpack.c.b16 %v1690, %v1686
    %v1871 = vpack.c.b16 %v1691, %v1687
    %v1872 = vpack.c.b16 %v1692, %v1688
    %v1873 = vpack.c.b16 %v1697, %v1693
    %v1874 = vpack.c.b16 %v1698, %v1694
    %v1875 = vpack.c.b16 %v1699, %v1695
    %v1876 = vpack.c.b16 %v1700, %v1696
    %v1877 = vpack.c.b16 %v1705, %v1701
    %v1878 = vpack.c.b16 %v1706, %v1702
    %v1879 = vpack.c.b16 %v1707, %v1703
    %v1880 = vpack.c.b16 %v1708, %v1704
    %v1881 = vpack.c.b16 %v1713, %v1709
    %v1882 = vpack.c.b16 %v1714, %v1710
    %v1883 = vpack.c.b16 %v1715, %v1711
    %v1884 = vpack.c.b16 %v1716, %v1712
    %v1885 = vpack.c.b16 %v1721, %v1717
    %v1886 = vpack.c.b16 %v1722, %v1718
    %v1887 = vpack.c.b16 %v1723, %v1719
    %v1888 = vpack.c.b16 %v1724, %v1720
    %v1889 = vpack.c.b16 %v1729, %v1725
    %v1890 = vpack.c.b16 %v1730, %v1726
    %v1891 = vpack.c.b16 %v1731, %v1727
    %v1892 = vpack.c.b16 %v1732, %v1728
    %v1893 = vpack.c.b16 %v1737, %v1733
    %v1894 = vpack.c.b16 %v1738, %v1734
    %v1895 = vpack.c.b16 %v1739, %v1735
    %v1896 = vpack.c.b16 %v1740, %v1736
    %v1897 = vpack.c.b16 %v1745, %v1741
    %v1898 = vpack.c.b16 %v1746, %v1742
    %v1899 = vpack.c.b16 %v1747, %v1743
    %v1900 = vpack.c.b16 %v1748, %v1744
    %v1901 = vpack.c.b16 %v1753, %v1749
    %v1902 = vpack.c.b16 %v1754, %v1750
    %v1903 = vpack.c.b16 %v1755, %v1751
    %v1904 = vpack.c.b16 %v1756, %v1752
    %v1905 = vpack.c.b16 %v1761, %v1757
    %v1906 = vpack.c.b16 %v1762, %v1758
    %v1907 = vpack.c.b16 %v1763, %v1759
    %v1908 = vpack.c.b16 %v1764, %v1760
    %v1909 = vpack.c.b16 %v1769, %v1765
    %v1910 = vpack.c.b16 %v1770, %v1766
    %v1911 = vpack.c.b16 %v1771, %v1767
    %v1912 = vpack.c.b16 %v1772, %v1768
    %v1913 = vpack.c.b16 %v1777, %v1773
    %v1914 = vpack.c.b16 %v1778, %v1774
    %v1915 = vpack.c.b16 %v1779, %v1775
    %v1916 = vpack.c.b16 %v1780, %v1776
    %v1917 = vpack.c.b16 %v1785, %v1781
    %v1918 = vpack.c.b16 %v1786, %v1782
    %v1919 = vpack.c.b16 %v1787, %v1783
    %v1920 = vpack.c.b16 %v1788, %v1784
    %v1921 = vpack.c.b16 %v1793, %v1789
    %v1922 = vpack.c.b16 %v1794, %v1790
    %v1923 = vpack.c.b16 %v1795, %v1791
    %v1924 = vpack.c.b16 %v1796, %v1792
    %2053 = vmatpush.bf16.msra.mxu0 %v1825
    %2054 = vmatpush.bf16.msra.mxu0 %v1821
    %2055 = vmatpush.bf16.msra.mxu0 %v1817
    %2056 = vmatpush.bf16.msra.mxu0 %v1813
    %2057 = vmatpush.bf16.msra.mxu0 %v1809
    %2058 = vmatpush.bf16.msra.mxu0 %v1805
    %2059 = vmatpush.bf16.msra.mxu0 %v1801
    %2060 = vmatpush.bf16.msra.mxu0 %v1797
    %2061 = vmatmul.bf16.gmra.mxu0 %v1405
    %v2062 = vpop.f32.mrf.mxu0
    %v2063 = vadd.f32 %v1385, %v2062
    %v2064 = vpop.f32.mrf.mxu0
    %v2065 = vadd.f32 %v1385, %v2064
    %2066 = vdwg.mxu0
    %2067 = vmatpush.bf16.msra.mxu0 %v1857
    %2068 = vmatpush.bf16.msra.mxu0 %v1853
    %2069 = vmatpush.bf16.msra.mxu0 %v1849
    %2070 = vmatpush.bf16.msra.mxu0 %v1845
    %2071 = vmatpush.bf16.msra.mxu0 %v1841
    %2072 = vmatpush.bf16.msra.mxu0 %v1837
    %2073 = vmatpush.bf16.msra.mxu0 %v1833
    %2074 = vmatpush.bf16.msra.mxu0 %v1829
    %2075 = vmatmul.bf16.gmra.mxu0 %v1406
    %v2076 = vpop.f32.mrf.mxu0
    %v2077 = vadd.f32 %v2063, %v2076
    %v2078 = vpop.f32.mrf.mxu0
    %v2079 = vadd.f32 %v2065, %v2078
    %2080 = vdwg.mxu0
    %2081 = vmatpush.bf16.msra.mxu0 %v1889
    %2082 = vmatpush.bf16.msra.mxu0 %v1885
    %2083 = vmatpush.bf16.msra.mxu0 %v1881
    %2084 = vmatpush.bf16.msra.mxu0 %v1877
    %2085 = vmatpush.bf16.msra.mxu0 %v1873
    %2086 = vmatpush.bf16.msra.mxu0 %v1869
    %2087 = vmatpush.bf16.msra.mxu0 %v1865
    %2088 = vmatpush.bf16.msra.mxu0 %v1861
    %2089 = vmatmul.bf16.gmra.mxu0 %v1407
    %v2090 = vpop.f32.mrf.mxu0
    %v2091 = vadd.f32 %v2077, %v2090
    %v2092 = vpop.f32.mrf.mxu0
    %v2093 = vadd.f32 %v2079, %v2092
    %2094 = vdwg.mxu0
    %2095 = vmatpush.bf16.msra.mxu0 %v1921
    %2096 = vmatpush.bf16.msra.mxu0 %v1917
    %2097 = vmatpush.bf16.msra.mxu0 %v1913
    %2098 = vmatpush.bf16.msra.mxu0 %v1909
    %2099 = vmatpush.bf16.msra.mxu0 %v1905
    %2100 = vmatpush.bf16.msra.mxu0 %v1901
    %2101 = vmatpush.bf16.msra.mxu0 %v1897
    %2102 = vmatpush.bf16.msra.mxu0 %v1893
    %2103 = vmatmul.bf16.gmra.mxu0 %v1408
    %v2104 = vpop.f32.mrf.mxu0
    %v2105 = vadd.f32 %v2091, %v2104
    %v2106 = vpop.f32.mrf.mxu0
    %v2107 = vadd.f32 %v2093, %v2106
    %2108 = vdwg.mxu0
    %2109 = vmatpush.bf16.msra.mxu0 %v1826
    %2110 = vmatpush.bf16.msra.mxu0 %v1822
    %2111 = vmatpush.bf16.msra.mxu0 %v1818
    %2112 = vmatpush.bf16.msra.mxu0 %v1814
    %2113 = vmatpush.bf16.msra.mxu0 %v1810
    %2114 = vmatpush.bf16.msra.mxu0 %v1806
    %2115 = vmatpush.bf16.msra.mxu0 %v1802
    %2116 = vmatpush.bf16.msra.mxu0 %v1798
    %2117 = vmatmul.bf16.gmra.mxu0 %v1405
    %v2118 = vpop.f32.mrf.mxu0
    %v2119 = vadd.f32 %v1386, %v2118
    %v2120 = vpop.f32.mrf.mxu0
    %v2121 = vadd.f32 %v1386, %v2120
    %2122 = vdwg.mxu0
    %2123 = vmatpush.bf16.msra.mxu0 %v1858
    %2124 = vmatpush.bf16.msra.mxu0 %v1854
    %2125 = vmatpush.bf16.msra.mxu0 %v1850
    %2126 = vmatpush.bf16.msra.mxu0 %v1846
    %2127 = vmatpush.bf16.msra.mxu0 %v1842
    %2128 = vmatpush.bf16.msra.mxu0 %v1838
    %2129 = vmatpush.bf16.msra.mxu0 %v1834
    %2130 = vmatpush.bf16.msra.mxu0 %v1830
    %2131 = vmatmul.bf16.gmra.mxu0 %v1406
    %v2132 = vpop.f32.mrf.mxu0
    %v2133 = vadd.f32 %v2119, %v2132
    %v2134 = vpop.f32.mrf.mxu0
    %v2135 = vadd.f32 %v2121, %v2134
    %2136 = vdwg.mxu0
    %2137 = vmatpush.bf16.msra.mxu0 %v1890
    %2138 = vmatpush.bf16.msra.mxu0 %v1886
    %2139 = vmatpush.bf16.msra.mxu0 %v1882
    %2140 = vmatpush.bf16.msra.mxu0 %v1878
    %2141 = vmatpush.bf16.msra.mxu0 %v1874
    %2142 = vmatpush.bf16.msra.mxu0 %v1870
    %2143 = vmatpush.bf16.msra.mxu0 %v1866
    %2144 = vmatpush.bf16.msra.mxu0 %v1862
    %2145 = vmatmul.bf16.gmra.mxu0 %v1407
    %v2146 = vpop.f32.mrf.mxu0
    %v2147 = vadd.f32 %v2133, %v2146
    %v2148 = vpop.f32.mrf.mxu0
    %v2149 = vadd.f32 %v2135, %v2148
    %2150 = vdwg.mxu0
    %2151 = vmatpush.bf16.msra.mxu0 %v1922
    %2152 = vmatpush.bf16.msra.mxu0 %v1918
    %2153 = vmatpush.bf16.msra.mxu0 %v1914
    %2154 = vmatpush.bf16.msra.mxu0 %v1910
    %2155 = vmatpush.bf16.msra.mxu0 %v1906
    %2156 = vmatpush.bf16.msra.mxu0 %v1902
    %2157 = vmatpush.bf16.msra.mxu0 %v1898
    %2158 = vmatpush.bf16.msra.mxu0 %v1894
    %2159 = vmatmul.bf16.gmra.mxu0 %v1408
    %v2160 = vpop.f32.mrf.mxu0
    %v2161 = vadd.f32 %v2147, %v2160
    %v2162 = vpop.f32.mrf.mxu0
    %v2163 = vadd.f32 %v2149, %v2162
    %2164 = vdwg.mxu0
    %2165 = vmatpush.bf16.msra.mxu0 %v1827
    %2166 = vmatpush.bf16.msra.mxu0 %v1823
    %2167 = vmatpush.bf16.msra.mxu0 %v1819
    %2168 = vmatpush.bf16.msra.mxu0 %v1815
    %2169 = vmatpush.bf16.msra.mxu0 %v1811
    %2170 = vmatpush.bf16.msra.mxu0 %v1807
    %2171 = vmatpush.bf16.msra.mxu0 %v1803
    %2172 = vmatpush.bf16.msra.mxu0 %v1799
    %2173 = vmatmul.bf16.gmra.mxu0 %v1405
    %v2174 = vpop.f32.mrf.mxu0
    %v2175 = vadd.f32 %v1387, %v2174
    %v2176 = vpop.f32.mrf.mxu0
    %v2177 = vadd.f32 %v1387, %v2176
    %2178 = vdwg.mxu0
    %2179 = vmatpush.bf16.msra.mxu0 %v1859
    %2180 = vmatpush.bf16.msra.mxu0 %v1855
    %2181 = vmatpush.bf16.msra.mxu0 %v1851
    %2182 = vmatpush.bf16.msra.mxu0 %v1847
    %2183 = vmatpush.bf16.msra.mxu0 %v1843
    %2184 = vmatpush.bf16.msra.mxu0 %v1839
    %2185 = vmatpush.bf16.msra.mxu0 %v1835
    %2186 = vmatpush.bf16.msra.mxu0 %v1831
    %2187 = vmatmul.bf16.gmra.mxu0 %v1406
    %v2188 = vpop.f32.mrf.mxu0
    %v2189 = vadd.f32 %v2175, %v2188
    %v2190 = vpop.f32.mrf.mxu0
    %v2191 = vadd.f32 %v2177, %v2190
    %2192 = vdwg.mxu0
    %2193 = vmatpush.bf16.msra.mxu0 %v1891
    %2194 = vmatpush.bf16.msra.mxu0 %v1887
    %2195 = vmatpush.bf16.msra.mxu0 %v1883
    %2196 = vmatpush.bf16.msra.mxu0 %v1879
    %2197 = vmatpush.bf16.msra.mxu0 %v1875
    %2198 = vmatpush.bf16.msra.mxu0 %v1871
    %2199 = vmatpush.bf16.msra.mxu0 %v1867
    %2200 = vmatpush.bf16.msra.mxu0 %v1863
    %2201 = vmatmul.bf16.gmra.mxu0 %v1407
    %v2202 = vpop.f32.mrf.mxu0
    %v2203 = vadd.f32 %v2189, %v2202
    %v2204 = vpop.f32.mrf.mxu0
    %v2205 = vadd.f32 %v2191, %v2204
    %2206 = vdwg.mxu0
    %2207 = vmatpush.bf16.msra.mxu0 %v1923
    %2208 = vmatpush.bf16.msra.mxu0 %v1919
    %2209 = vmatpush.bf16.msra.mxu0 %v1915
    %2210 = vmatpush.bf16.msra.mxu0 %v1911
    %2211 = vmatpush.bf16.msra.mxu0 %v1907
    %2212 = vmatpush.bf16.msra.mxu0 %v1903
    %2213 = vmatpush.bf16.msra.mxu0 %v1899
    %2214 = vmatpush.bf16.msra.mxu0 %v1895
    %2215 = vmatmul.bf16.gmra.mxu0 %v1408
    %v2216 = vpop.f32.mrf.mxu0
    %v2217 = vadd.f32 %v2203, %v2216
    %v2218 = vpop.f32.mrf.mxu0
    %v2219 = vadd.f32 %v2205, %v2218
    %2220 = vdwg.mxu0
    %2221 = vmatpush.bf16.msra.mxu0 %v1828
    %2222 = vmatpush.bf16.msra.mxu0 %v1824
    %2223 = vmatpush.bf16.msra.mxu0 %v1820
    %2224 = vmatpush.bf16.msra.mxu0 %v1816
    %2225 = vmatpush.bf16.msra.mxu0 %v1812
    %2226 = vmatpush.bf16.msra.mxu0 %v1808
    %2227 = vmatpush.bf16.msra.mxu0 %v1804
    %2228 = vmatpush.bf16.msra.mxu0 %v1800
    %2229 = vmatmul.bf16.gmra.mxu0 %v1405
    %v2230 = vpop.f32.mrf.mxu0
    %v2231 = vadd.f32 %v1388, %v2230
    %v2232 = vpop.f32.mrf.mxu0
    %v2233 = vadd.f32 %v1388, %v2232
    %2234 = vdwg.mxu0
    %2235 = vmatpush.bf16.msra.mxu0 %v1860
    %2236 = vmatpush.bf16.msra.mxu0 %v1856
    %2237 = vmatpush.bf16.msra.mxu0 %v1852
    %2238 = vmatpush.bf16.msra.mxu0 %v1848
    %2239 = vmatpush.bf16.msra.mxu0 %v1844
    %2240 = vmatpush.bf16.msra.mxu0 %v1840
    %2241 = vmatpush.bf16.msra.mxu0 %v1836
    %2242 = vmatpush.bf16.msra.mxu0 %v1832
    %2243 = vmatmul.bf16.gmra.mxu0 %v1406
    %v2244 = vpop.f32.mrf.mxu0
    %v2245 = vadd.f32 %v2231, %v2244
    %v2246 = vpop.f32.mrf.mxu0
    %v2247 = vadd.f32 %v2233, %v2246
    %2248 = vdwg.mxu0
    %2249 = vmatpush.bf16.msra.mxu0 %v1892
    %2250 = vmatpush.bf16.msra.mxu0 %v1888
    %2251 = vmatpush.bf16.msra.mxu0 %v1884
    %2252 = vmatpush.bf16.msra.mxu0 %v1880
    %2253 = vmatpush.bf16.msra.mxu0 %v1876
    %2254 = vmatpush.bf16.msra.mxu0 %v1872
    %2255 = vmatpush.bf16.msra.mxu0 %v1868
    %2256 = vmatpush.bf16.msra.mxu0 %v1864
    %2257 = vmatmul.bf16.gmra.mxu0 %v1407
    %v2258 = vpop.f32.mrf.mxu0
    %v2259 = vadd.f32 %v2245, %v2258
    %v2260 = vpop.f32.mrf.mxu0
    %v2261 = vadd.f32 %v2247, %v2260
    %2262 = vdwg.mxu0
    %2263 = vmatpush.bf16.msra.mxu0 %v1924
    %2264 = vmatpush.bf16.msra.mxu0 %v1920
    %2265 = vmatpush.bf16.msra.mxu0 %v1916
    %2266 = vmatpush.bf16.msra.mxu0 %v1912
    %2267 = vmatpush.bf16.msra.mxu0 %v1908
    %2268 = vmatpush.bf16.msra.mxu0 %v1904
    %2269 = vmatpush.bf16.msra.mxu0 %v1900
    %2270 = vmatpush.bf16.msra.mxu0 %v1896
    %2271 = vmatmul.bf16.gmra.mxu0 %v1408
    %v2272 = vpop.f32.mrf.mxu0
    %v2273 = vadd.f32 %v2259, %v2272
    %v2274 = vpop.f32.mrf.mxu0
    %v2275 = vadd.f32 %v2261, %v2274
    %2276 = vdwg.mxu0
    %v2277 = vmax.f32 %v2105, 0.0
    %v2278 = vmax.f32 %v2161, 0.0
    %v2279 = vmax.f32 %v2217, 0.0
    %v2280 = vmax.f32 %v2273, 0.0
    %v2281 = vmax.f32 %v2107, 0.0
    %v2282 = vmax.f32 %v2163, 0.0
    %v2283 = vmax.f32 %v2219, 0.0
    %v2284 = vmax.f32 %v2275, 0.0
    %v2285 = vpack.c.bf16 %v2278, %v2277
    %v2286 = vpack.c.bf16 %v2280, %v2279
    %v2287 = vpack.c.bf16 %v2282, %v2281
    %v2288 = vpack.c.bf16 %v2284, %v2283
    %2289 = vst [vmem:[#allocation2] sm:$0xff] %v2285
    %2290 = vst [vmem:[#allocation2 + $0x8] sm:$0xff] %v2286
    %2291 = vst [vmem:[#allocation2 + $0x10] sm:$0xff] %v2287
    %2292 = vst [vmem:[#allocation2 + $0x18] sm:$0xff] %v2288
    %v2293 = vld [vmem:[#allocation2] sm:$0xff]
    %v2294 = vld [vmem:[#allocation2 + $0x8] sm:$0xff]
    %v2295 = vld [vmem:[#allocation2 + $0x10] sm:$0xff]
    %v2296 = vld [vmem:[#allocation2 + $0x18] sm:$0xff]
    %v2297 = vld [vmem:[#allocation8] sm:$0xf]
    %v2298 = vld [vmem:[#allocation8 + $0x4] sm:$0xf]
    %v2299 = vld [vmem:[#allocation8 + $0x8] sm:$0xf]
    %v2300 = vld [vmem:[#allocation8 + $0xc] sm:$0xf]
    %v2301 = vld [vmem:[#allocation8 + $0x10] sm:$0xf]
    %v2302 = vld [vmem:[#allocation8 + $0x14] sm:$0xf]
    %v2303 = vld [vmem:[#allocation8 + $0x18] sm:$0xf]
    %v2304 = vld [vmem:[#allocation8 + $0x1c] sm:$0xf]
    %v2305 = vld [vmem:[#allocation8 + $0x20] sm:$0xf]
    %v2306 = vld [vmem:[#allocation8 + $0x24] sm:$0xf]
    %v2307 = vld [vmem:[#allocation8 + $0x28] sm:$0xf]
    %v2308 = vld [vmem:[#allocation8 + $0x2c] sm:$0xf]
    %v2309 = vld [vmem:[#allocation8 + $0x30] sm:$0xf]
    %v2310 = vld [vmem:[#allocation8 + $0x34] sm:$0xf]
    %v2311 = vld [vmem:[#allocation8 + $0x38] sm:$0xf]
    %v2312 = vld [vmem:[#allocation8 + $0x3c] sm:$0xf]
    %v2313 = vld [vmem:[#allocation8 + $0x40] sm:$0xf]
    %v2314 = vld [vmem:[#allocation8 + $0x44] sm:$0xf]
    %v2315 = vld [vmem:[#allocation8 + $0x48] sm:$0xf]
    %v2316 = vld [vmem:[#allocation8 + $0x4c] sm:$0xf]
    %v2317 = vld [vmem:[#allocation8 + $0x50] sm:$0xf]
    %v2318 = vld [vmem:[#allocation8 + $0x54] sm:$0xf]
    %v2319 = vld [vmem:[#allocation8 + $0x58] sm:$0xf]
    %v2320 = vld [vmem:[#allocation8 + $0x5c] sm:$0xf]
    %v2321 = vld [vmem:[#allocation8 + $0x60] sm:$0xf]
    %v2322 = vld [vmem:[#allocation8 + $0x64] sm:$0xf]
    %v2323 = vld [vmem:[#allocation8 + $0x68] sm:$0xf]
    %v2324 = vld [vmem:[#allocation8 + $0x6c] sm:$0xf]
    %v2325 = vld [vmem:[#allocation8 + $0x70] sm:$0xf]
    %v2326 = vld [vmem:[#allocation8 + $0x74] sm:$0xf]
    %v2327 = vld [vmem:[#allocation8 + $0x78] sm:$0xf]
    %v2328 = vld [vmem:[#allocation8 + $0x7c] sm:$0xf]
    %v2329 = vld [vmem:[#allocation8 + $0x80] sm:$0xf]
    %v2330 = vld [vmem:[#allocation8 + $0x84] sm:$0xf]
    %v2331 = vld [vmem:[#allocation8 + $0x88] sm:$0xf]
    %v2332 = vld [vmem:[#allocation8 + $0x8c] sm:$0xf]
    %v2333 = vld [vmem:[#allocation8 + $0x90] sm:$0xf]
    %v2334 = vld [vmem:[#allocation8 + $0x94] sm:$0xf]
    %v2335 = vld [vmem:[#allocation8 + $0x98] sm:$0xf]
    %v2336 = vld [vmem:[#allocation8 + $0x9c] sm:$0xf]
    %v2337 = vld [vmem:[#allocation8 + $0xa0] sm:$0xf]
    %v2338 = vld [vmem:[#allocation8 + $0xa4] sm:$0xf]
    %v2339 = vld [vmem:[#allocation8 + $0xa8] sm:$0xf]
    %v2340 = vld [vmem:[#allocation8 + $0xac] sm:$0xf]
    %v2341 = vld [vmem:[#allocation8 + $0xb0] sm:$0xf]
    %v2342 = vld [vmem:[#allocation8 + $0xb4] sm:$0xf]
    %v2343 = vld [vmem:[#allocation8 + $0xb8] sm:$0xf]
    %v2344 = vld [vmem:[#allocation8 + $0xbc] sm:$0xf]
    %v2345 = vld [vmem:[#allocation8 + $0xc0] sm:$0xf]
    %v2346 = vld [vmem:[#allocation8 + $0xc4] sm:$0xf]
    %v2347 = vld [vmem:[#allocation8 + $0xc8] sm:$0xf]
    %v2348 = vld [vmem:[#allocation8 + $0xcc] sm:$0xf]
    %v2349 = vld [vmem:[#allocation8 + $0xd0] sm:$0xf]
    %v2350 = vld [vmem:[#allocation8 + $0xd4] sm:$0xf]
    %v2351 = vld [vmem:[#allocation8 + $0xd8] sm:$0xf]
    %v2352 = vld [vmem:[#allocation8 + $0xdc] sm:$0xf]
    %v2353 = vld [vmem:[#allocation8 + $0xe0] sm:$0xf]
    %v2354 = vld [vmem:[#allocation8 + $0xe4] sm:$0xf]
    %v2355 = vld [vmem:[#allocation8 + $0xe8] sm:$0xf]
    %v2356 = vld [vmem:[#allocation8 + $0xec] sm:$0xf]
    %v2357 = vld [vmem:[#allocation8 + $0xf0] sm:$0xf]
    %v2358 = vld [vmem:[#allocation8 + $0xf4] sm:$0xf]
    %v2359 = vld [vmem:[#allocation8 + $0xf8] sm:$0xf]
    %v2360 = vld [vmem:[#allocation8 + $0xfc] sm:$0xf]
    %v2361 = vld [vmem:[%s8] sm:$0x1]
    %v2363 = vperm.slane %v2361, 0
    %v2369 = vunpack.c.l.b16 %v2293
    %v2370 = vunpack.c.h.b16 %v2293
    %v2371 = vunpack.c.l.b16 %v2294
    %v2372 = vunpack.c.h.b16 %v2294
    %v2373 = vunpack.c.l.b16 %v2295
    %v2374 = vunpack.c.h.b16 %v2295
    %v2375 = vunpack.c.l.b16 %v2296
    %v2376 = vunpack.c.h.b16 %v2296
    %v2377 = vpack.c.b16 %v2373, %v2369
    %v2378 = vpack.c.b16 %v2374, %v2370
    %v2379 = vpack.c.b16 %v2375, %v2371
    %v2380 = vpack.c.b16 %v2376, %v2372
    %v2449 = vunpack.c.l.b16 %v2297
    %v2450 = vunpack.c.l.b16 %v2298
    %v2451 = vunpack.c.l.b16 %v2299
    %v2452 = vunpack.c.l.b16 %v2300
    %v2453 = vunpack.c.l.b16 %v2301
    %v2454 = vunpack.c.l.b16 %v2302
    %v2455 = vunpack.c.l.b16 %v2303
    %v2456 = vunpack.c.l.b16 %v2304
    %v2457 = vunpack.c.l.b16 %v2305
    %v2458 = vunpack.c.l.b16 %v2306
    %v2459 = vunpack.c.l.b16 %v2307
    %v2460 = vunpack.c.l.b16 %v2308
    %v2461 = vunpack.c.l.b16 %v2309
    %v2462 = vunpack.c.l.b16 %v2310
    %v2463 = vunpack.c.l.b16 %v2311
    %v2464 = vunpack.c.l.b16 %v2312
    %v2465 = vunpack.c.l.b16 %v2313
    %v2466 = vunpack.c.l.b16 %v2314
    %v2467 = vunpack.c.l.b16 %v2315
    %v2468 = vunpack.c.l.b16 %v2316
    %v2469 = vunpack.c.l.b16 %v2317
    %v2470 = vunpack.c.l.b16 %v2318
    %v2471 = vunpack.c.l.b16 %v2319
    %v2472 = vunpack.c.l.b16 %v2320
    %v2473 = vunpack.c.l.b16 %v2321
    %v2474 = vunpack.c.l.b16 %v2322
    %v2475 = vunpack.c.l.b16 %v2323
    %v2476 = vunpack.c.l.b16 %v2324
    %v2477 = vunpack.c.l.b16 %v2325
    %v2478 = vunpack.c.l.b16 %v2326
    %v2479 = vunpack.c.l.b16 %v2327
    %v2480 = vunpack.c.l.b16 %v2328
    %v2481 = vunpack.c.l.b16 %v2329
    %v2482 = vunpack.c.l.b16 %v2330
    %v2483 = vunpack.c.l.b16 %v2331
    %v2484 = vunpack.c.l.b16 %v2332
    %v2485 = vunpack.c.l.b16 %v2333
    %v2486 = vunpack.c.l.b16 %v2334
    %v2487 = vunpack.c.l.b16 %v2335
    %v2488 = vunpack.c.l.b16 %v2336
    %v2489 = vunpack.c.l.b16 %v2337
    %v2490 = vunpack.c.l.b16 %v2338
    %v2491 = vunpack.c.l.b16 %v2339
    %v2492 = vunpack.c.l.b16 %v2340
    %v2493 = vunpack.c.l.b16 %v2341
    %v2494 = vunpack.c.l.b16 %v2342
    %v2495 = vunpack.c.l.b16 %v2343
    %v2496 = vunpack.c.l.b16 %v2344
    %v2497 = vunpack.c.l.b16 %v2345
    %v2498 = vunpack.c.l.b16 %v2346
    %v2499 = vunpack.c.l.b16 %v2347
    %v2500 = vunpack.c.l.b16 %v2348
    %v2501 = vunpack.c.l.b16 %v2349
    %v2502 = vunpack.c.l.b16 %v2350
    %v2503 = vunpack.c.l.b16 %v2351
    %v2504 = vunpack.c.l.b16 %v2352
    %v2505 = vunpack.c.l.b16 %v2353
    %v2506 = vunpack.c.l.b16 %v2354
    %v2507 = vunpack.c.l.b16 %v2355
    %v2508 = vunpack.c.l.b16 %v2356
    %v2509 = vunpack.c.l.b16 %v2357
    %v2510 = vunpack.c.l.b16 %v2358
    %v2511 = vunpack.c.l.b16 %v2359
    %v2512 = vunpack.c.l.b16 %v2360
    %v2513 = vpack.c.b16 %v2450, %v2449
    %v2514 = vpack.c.b16 %v2452, %v2451
    %v2515 = vpack.c.b16 %v2454, %v2453
    %v2516 = vpack.c.b16 %v2456, %v2455
    %v2517 = vpack.c.b16 %v2458, %v2457
    %v2518 = vpack.c.b16 %v2460, %v2459
    %v2519 = vpack.c.b16 %v2462, %v2461
    %v2520 = vpack.c.b16 %v2464, %v2463
    %v2521 = vpack.c.b16 %v2466, %v2465
    %v2522 = vpack.c.b16 %v2468, %v2467
    %v2523 = vpack.c.b16 %v2470, %v2469
    %v2524 = vpack.c.b16 %v2472, %v2471
    %v2525 = vpack.c.b16 %v2474, %v2473
    %v2526 = vpack.c.b16 %v2476, %v2475
    %v2527 = vpack.c.b16 %v2478, %v2477
    %v2528 = vpack.c.b16 %v2480, %v2479
    %v2529 = vpack.c.b16 %v2482, %v2481
    %v2530 = vpack.c.b16 %v2484, %v2483
    %v2531 = vpack.c.b16 %v2486, %v2485
    %v2532 = vpack.c.b16 %v2488, %v2487
    %v2533 = vpack.c.b16 %v2490, %v2489
    %v2534 = vpack.c.b16 %v2492, %v2491
    %v2535 = vpack.c.b16 %v2494, %v2493
    %v2536 = vpack.c.b16 %v2496, %v2495
    %v2537 = vpack.c.b16 %v2498, %v2497
    %v2538 = vpack.c.b16 %v2500, %v2499
    %v2539 = vpack.c.b16 %v2502, %v2501
    %v2540 = vpack.c.b16 %v2504, %v2503
    %v2541 = vpack.c.b16 %v2506, %v2505
    %v2542 = vpack.c.b16 %v2508, %v2507
    %v2543 = vpack.c.b16 %v2510, %v2509
    %v2544 = vpack.c.b16 %v2512, %v2511
    %2577 = vmatpush.bf16.msra.mxu0 %v2520
    %2578 = vmatpush.bf16.msra.mxu0 %v2519
    %2579 = vmatpush.bf16.msra.mxu0 %v2518
    %2580 = vmatpush.bf16.msra.mxu0 %v2517
    %2581 = vmatpush.bf16.msra.mxu0 %v2516
    %2582 = vmatpush.bf16.msra.mxu0 %v2515
    %2583 = vmatpush.bf16.msra.mxu0 %v2514
    %2584 = vmatpush.bf16.msra.mxu0 %v2513
    %2585 = vmatmul.bf16.gmra.mxu0 %v2377
    %v2586 = vpop.f32.mrf.mxu0
    %v2587 = vadd.f32 %v2363, %v2586
    %v2588 = vpop.f32.mrf.mxu0
    %v2589 = vadd.f32 %v2363, %v2588
    %2590 = vdwg.mxu0
    %2591 = vmatpush.bf16.msra.mxu0 %v2528
    %2592 = vmatpush.bf16.msra.mxu0 %v2527
    %2593 = vmatpush.bf16.msra.mxu0 %v2526
    %2594 = vmatpush.bf16.msra.mxu0 %v2525
    %2595 = vmatpush.bf16.msra.mxu0 %v2524
    %2596 = vmatpush.bf16.msra.mxu0 %v2523
    %2597 = vmatpush.bf16.msra.mxu0 %v2522
    %2598 = vmatpush.bf16.msra.mxu0 %v2521
    %2599 = vmatmul.bf16.gmra.mxu0 %v2378
    %v2600 = vpop.f32.mrf.mxu0
    %v2601 = vadd.f32 %v2587, %v2600
    %v2602 = vpop.f32.mrf.mxu0
    %v2603 = vadd.f32 %v2589, %v2602
    %2604 = vdwg.mxu0
    %2605 = vmatpush.bf16.msra.mxu0 %v2536
    %2606 = vmatpush.bf16.msra.mxu0 %v2535
    %2607 = vmatpush.bf16.msra.mxu0 %v2534
    %2608 = vmatpush.bf16.msra.mxu0 %v2533
    %2609 = vmatpush.bf16.msra.mxu0 %v2532
    %2610 = vmatpush.bf16.msra.mxu0 %v2531
    %2611 = vmatpush.bf16.msra.mxu0 %v2530
    %2612 = vmatpush.bf16.msra.mxu0 %v2529
    %2613 = vmatmul.bf16.gmra.mxu0 %v2379
    %v2614 = vpop.f32.mrf.mxu0
    %v2615 = vadd.f32 %v2601, %v2614
    %v2616 = vpop.f32.mrf.mxu0
    %v2617 = vadd.f32 %v2603, %v2616
    %2618 = vdwg.mxu0
    %2619 = vmatpush.bf16.msra.mxu0 %v2544
    %2620 = vmatpush.bf16.msra.mxu0 %v2543
    %2621 = vmatpush.bf16.msra.mxu0 %v2542
    %2622 = vmatpush.bf16.msra.mxu0 %v2541
    %2623 = vmatpush.bf16.msra.mxu0 %v2540
    %2624 = vmatpush.bf16.msra.mxu0 %v2539
    %2625 = vmatpush.bf16.msra.mxu0 %v2538
    %2626 = vmatpush.bf16.msra.mxu0 %v2537
    %2627 = vmatmul.bf16.gmra.mxu0 %v2380
    %v2628 = vpop.f32.mrf.mxu0
    %v2629 = vadd.f32 %v2615, %v2628
    %v2630 = vpop.f32.mrf.mxu0
    %v2631 = vadd.f32 %v2617, %v2630
    %2632 = vdwg.mxu0
    %2633 = vst [vmem:[%s9] sm:$0xff] %v2629
    %2634 = vst [vmem:[%s9 + $0x8] sm:$0xff] %v2631
    // Predicated region
    $region54: #{policy_forward.1} parent=1 // pred_check
      _
    $region55: #{policy_forward.1} parent=1 // pred_check_branch
      %2636 = sbr.rel (0) target = $region57
    $region56: #{policy_forward.1} parent=1 // pred_region
      _
    $region57: #{policy_forward.1} parent=1 // pred_fallthru
      _
    // Predicated region
    $region58: #{policy_forward.1} parent=1 // pred_check
      _
    $region59: #{policy_forward.1} parent=1 // pred_check_branch
      %2638 = sbr.rel (0) target = $region61
    $region60: #{policy_forward.1} parent=1 // pred_region
      _
    $region61: #{policy_forward.1} parent=1 // pred_fallthru
      _
    %2639 = vsyncpa [#allocation4], 1
    %2640 = vsyncpa [#allocation6], 1
    %2641 = vsyncpa [#allocation9], 1

</llo_original>
